<compile_context>
chip_gen: v7x
topology: tpu7x:2x2x1
jax: 0.10.0
libtpu: 0.0.40
codegen_flags: <defaults>
</compile_context>

<pallas_src>
import math

import numpy as np
import jax
import jax.numpy as jnp
from jax.experimental import pallas as pl
from jax.experimental.pallas import tpu as pltpu

NEG_SLOPE = 0.01  # F.leaky_relu default negative slope

_VMEM = pl.BlockSpec(memory_space=pltpu.MemorySpace.VMEM)


def _leaky(y):
    return jnp.where(y >= 0.0, y, NEG_SLOPE * y)


# ----------------------------------------------------------------------------
# Single fused kernel: node path + batched edge path, two outputs.
#   Node path:
#     edge_weight = leaky(edge_attr(edge_inform))                 (E,1)
#     mean_w      = (oh_dst @ edge_weight) * inv_deg              (N,1)
#     x_agg       = A @ (mean_w * x)        (A = static adjacency, f32 exact)
#     x_i         = node_feature_signal(x_agg)
#   Edge path (all graphs batched; segment ids are disjoint per graph):
#     edge_mean   = (oh_dst @ edge_inform) * inv_deg              (N,Ce)
#     edge_sum    = oh_dst @ (keep * edge_inform)                 (N,Ce)
#     pair        = ((oh_s + oh_d) @ edge_sum - oh_e @ edge_inform) * pair_inv
#     gather_edge = oh_gp @ pair + oh_gm @ edge_mean              (R,Ce)
#     new_edge    = leaky(edge_change(gather_edge))
# ----------------------------------------------------------------------------
def _fused_kernel(x_ref, adj_ref, invdeg_ref, einf_ref, dst_ref, keep_ref,
                  sels_ref, seld_ref, sele_ref, gp_ref, gm_ref, pinv_ref,
                  wa_ref, ba_ref, ws_ref, bs_ref, wc_ref, bc_ref,
                  xi_ref, o_ref):
    n = x_ref.shape[0]
    e, ce = einf_ref.shape
    p = sels_ref.shape[0]
    r = gp_ref.shape[0]

    einf = einf_ref[...]                                          # (E, Ce)
    inv_deg = invdeg_ref[...]                                     # (N, 1), host-exact

    # edge_weight = leaky(edge_attr(edge_inform))
    ew = _leaky(jnp.dot(einf, wa_ref[...],
                        preferred_element_type=jnp.float32) + ba_ref[...])  # (E,1)

    # Single shared dst one-hot, reused by all three scatter matmuls.
    oh_dst = (jax.lax.broadcasted_iota(jnp.int32, (n, e), 0) == dst_ref[...]
              ).astype(jnp.float32)                               # (N, E)

    # --- node path -----------------------------------------------------------
    mean_w = jnp.dot(oh_dst, ew, preferred_element_type=jnp.float32) * inv_deg
    nwe = mean_w * x_ref[...]                                     # (N, Cin)
    # static adjacency replaces gather[src] + scatter[dst]; f32 -> exact
    x_agg = jnp.dot(adj_ref[...], nwe, preferred_element_type=jnp.float32)
    xi = jnp.dot(x_agg, ws_ref[...],
                 preferred_element_type=jnp.float32) + bs_ref[...]
    xi_ref[...] = xi.astype(xi_ref.dtype)

    # --- edge path (all graphs at once) --------------------------------------
    edge_mean = jnp.dot(oh_dst, einf,
                        preferred_element_type=jnp.float32) * inv_deg    # (N,Ce)
    # masked scatter-sum: keep-mask folded into the RHS (reuses oh_dst)
    edge_sum = jnp.dot(oh_dst, einf * keep_ref[...],
                       preferred_element_type=jnp.float32)               # (N,Ce)

    # pair rows: one "2-hot" selection matmul gives edge_sum[s] + edge_sum[d];
    # the denominator reciprocal 1/(deg_s + deg_d - 3) is static (host-exact).
    iota_pn = jax.lax.broadcasted_iota(jnp.int32, (p, n), 1)
    oh_sd = ((sels_ref[...] == iota_pn).astype(jnp.float32)
             + (seld_ref[...] == iota_pn).astype(jnp.float32))    # (P, N)
    oh_e = (sele_ref[...] == jax.lax.broadcasted_iota(jnp.int32, (p, e), 1)
            ).astype(jnp.float32)                                 # (P, E)
    pair = (jnp.dot(oh_sd, edge_sum, preferred_element_type=jnp.float32)
            - jnp.dot(oh_e, einf, preferred_element_type=jnp.float32)
            ) * pinv_ref[...]                                     # (P, Ce)

    # gather_edge row assembly: each output row picks exactly one pair row OR
    # one edge_mean row (index -1 selects nothing -> zero contribution).
    oh_gp = (gp_ref[...] == jax.lax.broadcasted_iota(jnp.int32, (r, p), 1)
             ).astype(jnp.float32)                                # (R, P)
    oh_gm = (gm_ref[...] == jax.lax.broadcasted_iota(jnp.int32, (r, n), 1)
             ).astype(jnp.float32)                                # (R, N)
    gather_edge = (jnp.dot(oh_gp, pair, preferred_element_type=jnp.float32)
                   + jnp.dot(oh_gm, edge_mean,
                             preferred_element_type=jnp.float32))  # (R, Ce)

    out = jnp.dot(gather_edge, wc_ref[...],
                  preferred_element_type=jnp.float32) + bc_ref[...]
    o_ref[...] = _leaky(out).astype(o_ref.dtype)


# ----------------------------------------------------------------------------
# Host-side static bookkeeping (pure numpy on host inputs -- no device syncs,
# provided edge_index / batch / edge_num arrive as host arrays/lists).
# ----------------------------------------------------------------------------
def _build_static_metadata(ei_np, batch_np, edge_num, n_nodes):
    # node_num per graph (same loop semantics as the torch module)
    node_num, num, t = [], 0, 0
    for i in batch_np:
        if int(i) == num:
            t += 1
        else:
            num += 1
            node_num.append(t)
            t = 1
    node_num.append(t)

    src = ei_np[0].astype(np.int64)
    dst = ei_np[1].astype(np.int64)
    E = int(dst.shape[0])

    # global in-degrees and their reciprocal (static: edge_index only)
    degrees = np.zeros((n_nodes,), np.float32)
    for d in dst:
        degrees[int(d)] += 1.0
    inv_deg = (1.0 / np.maximum(degrees, 1.0)).reshape(n_nodes, 1).astype(np.float32)

    # static adjacency A[i, j] = #edges j -> i (replaces gather[src]+scatter[dst])
    adj = np.zeros((n_nodes, n_nodes), np.float32)
    for e in range(E):
        adj[int(dst[e]), int(src[e])] += 1.0

    keep_col = np.ones((E, 1), np.float32)     # 0.0 for edges dropped by the mask
    sel_s, sel_d, sel_e, pair_inv = [], [], [], []
    entries = []                               # ("p", pair_idx) | ("m", global node)
    pair_count = 0
    off = 0
    super_node = 0
    for c, eg in enumerate(edge_num):
        aei = ei_np[:, off:off + eg]
        keep = []
        for i in range(eg):
            s = int(aei[0, i]); d = int(aei[1, i])
            if d == super_node + node_num[c] - 1 or d == s:
                keep_col[off + i, 0] = 0.0     # drop from the masked scatter
            else:
                keep.append(i)
        start = pair_count
        for k in range(0, len(keep), 2):       # every other kept edge
            i = keep[k]
            s = int(aei[0, i]); d = int(aei[1, i])
            sel_s.append(s); sel_d.append(d); sel_e.append(off + i)
            denom = float(degrees[s] + degrees[d] - 3.0)
            # matches the torch reference: /0 -> inf for degenerate degree-1 pairs
            pair_inv.append(np.inf if denom == 0.0 else 1.0 / denom)
            pair_count += 1
        for pidx in range(start, pair_count):  # each pair row appended twice
            entries.append(("p", pidx))
            entries.append(("p", pidx))
        max_local = int((aei[1] - super_node).max())
        for k in range(max_local + 1):         # full mean block
            entries.append(("m", super_node + k))
        for k in range(max_local):             # mean block minus last row
            entries.append(("m", super_node + k))
        super_node += node_num[c]
        off += eg

    p_dim = max(pair_count, 1)
    if pair_count == 0:
        # TODO(synk): degenerate no-pair case -- keep one dummy (never-selected) row.
        sel_s, sel_d, sel_e, pair_inv = [0], [0], [0], [0.0]

    gp = np.full((len(entries),), -1, np.int32)
    gm = np.full((len(entries),), -1, np.int32)
    for row, (kind, v) in enumerate(entries):
        if kind == "p":
            gp[row] = v
        else:
            gm[row] = v
    return {
        "adj": adj,
        "inv_deg": inv_deg,
        "dst_row": ei_np[1].astype(np.int32).reshape(1, E),
        "keep_col": keep_col,
        "sel_s": np.asarray(sel_s, np.int32).reshape(p_dim, 1),
        "sel_d": np.asarray(sel_d, np.int32).reshape(p_dim, 1),
        "sel_e": np.asarray(sel_e, np.int32).reshape(p_dim, 1),
        "pair_inv": np.asarray(pair_inv, np.float32).reshape(p_dim, 1),
        "gp_idx": gp.reshape(-1, 1),
        "gm_idx": gm.reshape(-1, 1),
    }


# ----------------------------------------------------------------------------
# Parameter init (deterministic, mirrors nn.Linear shapes of the module)
# ----------------------------------------------------------------------------
def init_params(key, in_channels, out_channels, edge_in, edge_out):
    def linear_init(k, fan_in, fan_out):
        k1, k2 = jax.random.split(k)
        bound = 1.0 / math.sqrt(fan_in)
        w = jax.random.uniform(k1, (fan_in, fan_out), jnp.float32, -bound, bound)
        b = jax.random.uniform(k2, (fan_out,), jnp.float32, -bound, bound)
        return w, b

    keys = jax.random.split(key, 7)
    return {
        "node_feature": linear_init(keys[0], in_channels, out_channels),
        "node_feature_self": linear_init(keys[1], in_channels, out_channels),
        "edge_change": linear_init(keys[2], edge_in, edge_out),
        "edge_attr": linear_init(keys[3], edge_in, 1),
        "g": linear_init(keys[4], in_channels * 2, 1),
        "node_feature_signal": linear_init(keys[5], in_channels, out_channels),
        "ComputeScore": linear_init(keys[6], in_channels, 1),
    }


# ----------------------------------------------------------------------------
# Forward pass: exactly ONE pallas_call, no host<->device ping-pong.
# ----------------------------------------------------------------------------
def forward(params, x, edge_index, edge_inform, batch, edge_num):
    x = jnp.asarray(x, jnp.float32)
    edge_inform = jnp.asarray(edge_inform, jnp.float32)
    # NOTE: edge_index / batch / edge_num must be host arrays (numpy / lists);
    # otherwise this bookkeeping would force a device->host transfer.
    ei_np = np.asarray(edge_index).astype(np.int32)
    batch_np = np.asarray(batch)
    N = int(x.shape[0])

    meta = _build_static_metadata(ei_np, batch_np, list(edge_num), N)

    wa, ba = params["edge_attr"]
    ws, bs = params["node_feature_signal"]
    wc, bc = params["edge_change"]
    R = meta["gp_idx"].shape[0]

    xi, new_edge_inform = pl.pallas_call(
        _fused_kernel,
        out_shape=(jax.ShapeDtypeStruct((N, ws.shape[1]), jnp.float32),
                   jax.ShapeDtypeStruct((R, wc.shape[1]), jnp.float32)),
        in_specs=[_VMEM] * 18,
        out_specs=(_VMEM, _VMEM),
        compiler_params=pltpu.CompilerParams(vmem_limit_bytes=32 * 1024 * 1024),
    )(x,
      jnp.asarray(meta["adj"]),
      jnp.asarray(meta["inv_deg"]),
      edge_inform,
      jnp.asarray(meta["dst_row"]),
      jnp.asarray(meta["keep_col"]),
      jnp.asarray(meta["sel_s"]),
      jnp.asarray(meta["sel_d"]),
      jnp.asarray(meta["sel_e"]),
      jnp.asarray(meta["gp_idx"]),
      jnp.asarray(meta["gm_idx"]),
      jnp.asarray(meta["pair_inv"]),
      wa, ba.reshape(1, 1),
      ws, bs.reshape(1, -1),
      wc, bc.reshape(1, -1))

    return xi, new_edge_inform


# ----------------------------------------------------------------------------
# Pure-numpy reference (mirrors the PyTorch forward) for a correctness check
# ----------------------------------------------------------------------------
def reference_forward(params, x, edge_index, edge_inform, batch, edge_num):
    x = np.asarray(x, np.float32)
    ei = np.asarray(edge_index)
    einf = np.asarray(edge_inform, np.float32)
    batch = np.asarray(batch)

    def lin(p, a, leaky=False):
        w = np.asarray(p[0], np.float32)
        b = np.asarray(p[1], np.float32)
        y = a @ w + b
        if leaky:
            y = np.where(y >= 0, y, NEG_SLOPE * y)
        return y

    def scat(vals, idx, reduce):
        nseg = int(idx.max()) + 1
        out = np.zeros((nseg, vals.shape[1]), np.float32)
        cnt = np.zeros(nseg, np.float32)
        for e in range(vals.shape[0]):
            out[int(idx[e])] += vals[e]
            cnt[int(idx[e])] += 1
        if reduce == "mean":
            out = out / np.maximum(cnt, 1.0)[:, None]
        return out

    N = x.shape[0]
    degrees = np.zeros(N, np.float32)
    for d in ei[1]:
        degrees[int(d)] += 1

    edge_weight = lin(params["edge_attr"], einf, leaky=True)
    node_with_edge = scat(edge_weight, ei[1], "mean") * x
    x_j = node_with_edge[ei[0]]
    x_i = scat(x_j, ei[1], "sum")
    x_i = lin(params["node_feature_signal"], x_i)

    node_num, num, t = [], 0, 0
    for i in batch:
        if int(i) == num:
            t += 1
        else:
            num += 1
            node_num.append(t)
            t = 1
    node_num.append(t)

    off = 0
    sub_ei, sub_einf = [], []
    for e in edge_num:
        sub_ei.append(ei[:, off:off + e])
        sub_einf.append(einf[off:off + e, :])
        off += e

    super_node = 0
    rows = []
    for c, aei in enumerate(sub_ei):
        Eg = aei.shape[1]
        mask = np.ones(Eg, bool)
        for i in range(Eg):
            if aei[1][i] == super_node + node_num[c] - 1 or aei[1][i] == aei[0][i]:
                mask[i] = False
        rsi = sub_einf[c][mask]
        rse = aei[:, mask]
        edge_i = scat(rsi, rse[1] - super_node, "sum")
        for i in range(0, rse.shape[1], 2):
            tmp = (edge_i[int(rse[0][i]) - super_node]
                   + edge_i[int(rse[1][i]) - super_node] - rsi[i])
            edge_norm = degrees[int(rse[0][i])] + degrees[int(rse[1][i])] - 2.0
            tmp = tmp / (edge_norm - 1.0)
            rows.append(tmp.reshape(1, -1))
            rows.append(tmp.reshape(1, -1))
        edge_i = scat(sub_einf[c], aei[1] - super_node, "mean")
        rows.append(edge_i)
        rows.append(edge_i[0:edge_i.shape[0] - 1, :])
        super_node += node_num[c]

    gather_edge = np.concatenate(rows, axis=0)
    new_edge_inform = lin(params["edge_change"], gather_edge, leaky=True)
    return x_i, new_edge_inform


# ----------------------------------------------------------------------------
if __name__ == "__main__":
    in_channels, out_channels = 8, 16
    edge_in_channels, edge_out_channels = 8, 16

    key = jax.random.PRNGKey(0)
    kx, ke, kp = jax.random.split(key, 3)
    params = init_params(kp, in_channels, out_channels,
                         edge_in_channels, edge_out_channels)

    # Two small graphs: graph 0 has 5 nodes (0..4, super node 4),
    # graph 1 has 4 nodes (5..8, super node 8).
    src0 = [0, 1, 1, 2, 2, 3, 0, 3, 0, 1, 2, 3]
    dst0 = [1, 0, 2, 1, 3, 2, 3, 0, 4, 4, 2, 4]
    src1 = [5, 6, 6, 7, 5, 7, 5, 6, 7, 7]
    dst1 = [6, 5, 7, 6, 7, 5, 8, 8, 7, 8]
    edge_index = np.array([src0 + src1, dst0 + dst1], dtype=np.int32)   # (2, 22)
    edge_num = [len(src0), len(src1)]
    batch = np.array([0] * 5 + [1] * 4, dtype=np.int32)                 # (9,)
    N, E = batch.shape[0], edge_index.shape[1]

    x = jax.random.normal(kx, (N, in_channels), jnp.float32)
    edge_inform = jax.random.normal(ke, (E, edge_in_channels), jnp.float32)

    x_i, new_edge_inform = forward(params, x, edge_index, edge_inform, batch, edge_num)
    jax.block_until_ready(x_i)
    jax.block_until_ready(new_edge_inform)

    ref_x_i, ref_edge = reference_forward(params, x, edge_index, edge_inform,
                                          batch, edge_num)
    np.testing.assert_allclose(np.asarray(x_i), ref_x_i, rtol=5e-2, atol=5e-2)
    np.testing.assert_allclose(np.asarray(new_edge_inform), ref_edge,
                               rtol=5e-2, atol=5e-2)

    print("KERNEL_OK")
</pallas_src>

<mosaic_0001>
module attributes {stable_mosaic.version = 11 : i64} {
  func.func @_fused_kernel(%arg0: memref<9x8xf32, #tpu.memory_space<vmem>>, %arg1: memref<9x9xf32, #tpu.memory_space<vmem>>, %arg2: memref<9x1xf32, #tpu.memory_space<vmem>>, %arg3: memref<22x8xf32, #tpu.memory_space<vmem>>, %arg4: memref<1x22xi32, #tpu.memory_space<vmem>>, %arg5: memref<22x1xf32, #tpu.memory_space<vmem>>, %arg6: memref<7x1xi32, #tpu.memory_space<vmem>>, %arg7: memref<7x1xi32, #tpu.memory_space<vmem>>, %arg8: memref<7x1xi32, #tpu.memory_space<vmem>>, %arg9: memref<30x1xi32, #tpu.memory_space<vmem>>, %arg10: memref<30x1xi32, #tpu.memory_space<vmem>>, %arg11: memref<7x1xf32, #tpu.memory_space<vmem>>, %arg12: memref<8x1xf32, #tpu.memory_space<vmem>>, %arg13: memref<1x1xf32, #tpu.memory_space<vmem>>, %arg14: memref<8x16xf32, #tpu.memory_space<vmem>>, %arg15: memref<1x16xf32, #tpu.memory_space<vmem>>, %arg16: memref<8x16xf32, #tpu.memory_space<vmem>>, %arg17: memref<1x16xf32, #tpu.memory_space<vmem>>, %arg18: memref<9x16xf32, #tpu.memory_space<vmem>>, %arg19: memref<30x16xf32, #tpu.memory_space<vmem>>) attributes {dimension_semantics = [], scalar_prefetch = 0 : i64, scratch_operands = 0 : i64, tpu.core_type = #tpu.core_type<tc>} {
    %c0 = arith.constant 0 : index
    %c0_0 = arith.constant 0 : index
    %0 = vector.load %arg3[%c0, %c0_0] : memref<22x8xf32, #tpu.memory_space<vmem>>, vector<22x8xf32>
    %c0_1 = arith.constant 0 : index
    %c0_2 = arith.constant 0 : index
    %1 = vector.load %arg2[%c0_1, %c0_2] : memref<9x1xf32, #tpu.memory_space<vmem>>, vector<9x1xf32>
    %c0_3 = arith.constant 0 : index
    %c0_4 = arith.constant 0 : index
    %2 = vector.load %arg12[%c0_3, %c0_4] : memref<8x1xf32, #tpu.memory_space<vmem>>, vector<8x1xf32>
    %cst = arith.constant dense<0.000000e+00> : vector<22x1xf32>
    %3 = tpu.matmul %0, %2, %cst {dimension_numbers = #tpu.dot_dimension_numbers<[1], [0], [0], [1], [0, 0, 1, 1], [], []>} : vector<22x8xf32>, vector<8x1xf32>, vector<22x1xf32> -> vector<22x1xf32>
    %c0_5 = arith.constant 0 : index
    %c0_6 = arith.constant 0 : index
    %4 = vector.load %arg13[%c0_5, %c0_6] : memref<1x1xf32, #tpu.memory_space<vmem>>, vector<1x1xf32>
    %5 = vector.broadcast %4 : vector<1x1xf32> to vector<22x1xf32>
    %6 = arith.addf %3, %5 : vector<22x1xf32>
    %cst_7 = arith.constant 0.000000e+00 : f32
    %7 = vector.broadcast %cst_7 : f32 to vector<22x1xf32>
    %8 = arith.cmpf oge, %6, %7 : vector<22x1xf32>
    %cst_8 = arith.constant 0.00999999977 : f32
    %9 = vector.broadcast %cst_8 : f32 to vector<22x1xf32>
    %10 = arith.mulf %9, %6 : vector<22x1xf32>
    %11 = arith.select %8, %6, %10 : vector<22x1xi1>, vector<22x1xf32>
    %12 = tpu.iota {dimensions = array<i32: 0>} : vector<9x22xi32>
    %c0_9 = arith.constant 0 : index
    %c0_10 = arith.constant 0 : index
    %13 = vector.load %arg4[%c0_9, %c0_10] : memref<1x22xi32, #tpu.memory_space<vmem>>, vector<1x22xi32>
    %14 = vector.broadcast %13 : vector<1x22xi32> to vector<9x22xi32>
    %15 = arith.cmpi eq, %12, %14 : vector<9x22xi32>
    %16 = arith.extui %15 : vector<9x22xi1> to vector<9x22xi32>
    %17 = arith.sitofp %16 : vector<9x22xi32> to vector<9x22xf32>
    %cst_11 = arith.constant dense<0.000000e+00> : vector<9x1xf32>
    %18 = tpu.matmul %17, %11, %cst_11 {dimension_numbers = #tpu.dot_dimension_numbers<[1], [0], [0], [1], [0, 0, 1, 1], [], []>} : vector<9x22xf32>, vector<22x1xf32>, vector<9x1xf32> -> vector<9x1xf32>
    %19 = arith.mulf %18, %1 : vector<9x1xf32>
    %c0_12 = arith.constant 0 : index
    %c0_13 = arith.constant 0 : index
    %20 = vector.load %arg0[%c0_12, %c0_13] : memref<9x8xf32, #tpu.memory_space<vmem>>, vector<9x8xf32>
    %21 = vector.broadcast %19 : vector<9x1xf32> to vector<9x8xf32>
    %22 = arith.mulf %21, %20 : vector<9x8xf32>
    %c0_14 = arith.constant 0 : index
    %c0_15 = arith.constant 0 : index
    %23 = vector.load %arg1[%c0_14, %c0_15] : memref<9x9xf32, #tpu.memory_space<vmem>>, vector<9x9xf32>
    %cst_16 = arith.constant dense<0.000000e+00> : vector<9x8xf32>
    %24 = tpu.matmul %23, %22, %cst_16 {dimension_numbers = #tpu.dot_dimension_numbers<[1], [0], [0], [1], [0, 0, 1, 1], [], []>} : vector<9x9xf32>, vector<9x8xf32>, vector<9x8xf32> -> vector<9x8xf32>
    %c0_17 = arith.constant 0 : index
    %c0_18 = arith.constant 0 : index
    %25 = vector.load %arg14[%c0_17, %c0_18] : memref<8x16xf32, #tpu.memory_space<vmem>>, vector<8x16xf32>
    %cst_19 = arith.constant dense<0.000000e+00> : vector<9x16xf32>
    %26 = tpu.matmul %24, %25, %cst_19 {dimension_numbers = #tpu.dot_dimension_numbers<[1], [0], [0], [1], [0, 0, 1, 1], [], []>} : vector<9x8xf32>, vector<8x16xf32>, vector<9x16xf32> -> vector<9x16xf32>
    %c0_20 = arith.constant 0 : index
    %c0_21 = arith.constant 0 : index
    %27 = vector.load %arg15[%c0_20, %c0_21] : memref<1x16xf32, #tpu.memory_space<vmem>>, vector<1x16xf32>
    %28 = vector.broadcast %27 : vector<1x16xf32> to vector<9x16xf32>
    %29 = arith.addf %26, %28 : vector<9x16xf32>
    %c0_22 = arith.constant 0 : index
    %c0_23 = arith.constant 0 : index
    %30 = vector.load %arg18[%c0_22, %c0_23] : memref<9x16xf32, #tpu.memory_space<vmem>>, vector<9x16xf32>
    tpu.vector_store %arg18[%c0_22, %c0_23], %29 {strides = array<i32>} : memref<9x16xf32, #tpu.memory_space<vmem>>, vector<9x16xf32>,
    %cst_24 = arith.constant dense<0.000000e+00> : vector<9x8xf32>
    %31 = tpu.matmul %17, %0, %cst_24 {dimension_numbers = #tpu.dot_dimension_numbers<[1], [0], [0], [1], [0, 0, 1, 1], [], []>} : vector<9x22xf32>, vector<22x8xf32>, vector<9x8xf32> -> vector<9x8xf32>
    %32 = vector.broadcast %1 : vector<9x1xf32> to vector<9x8xf32>
    %33 = arith.mulf %31, %32 : vector<9x8xf32>
    %c0_25 = arith.constant 0 : index
    %c0_26 = arith.constant 0 : index
    %34 = vector.load %arg5[%c0_25, %c0_26] : memref<22x1xf32, #tpu.memory_space<vmem>>, vector<22x1xf32>
    %35 = vector.broadcast %34 : vector<22x1xf32> to vector<22x8xf32>
    %36 = arith.mulf %0, %35 : vector<22x8xf32>
    %cst_27 = arith.constant dense<0.000000e+00> : vector<9x8xf32>
    %37 = tpu.matmul %17, %36, %cst_27 {dimension_numbers = #tpu.dot_dimension_numbers<[1], [0], [0], [1], [0, 0, 1, 1], [], []>} : vector<9x22xf32>, vector<22x8xf32>, vector<9x8xf32> -> vector<9x8xf32>
    %38 = tpu.iota {dimensions = array<i32: 1>} : vector<7x9xi32>
    %c0_28 = arith.constant 0 : index
    %c0_29 = arith.constant 0 : index
    %39 = vector.load %arg6[%c0_28, %c0_29] : memref<7x1xi32, #tpu.memory_space<vmem>>, vector<7x1xi32>
    %40 = vector.broadcast %39 : vector<7x1xi32> to vector<7x9xi32>
    %41 = arith.cmpi eq, %40, %38 : vector<7x9xi32>
    %42 = arith.extui %41 : vector<7x9xi1> to vector<7x9xi32>
    %43 = arith.sitofp %42 : vector<7x9xi32> to vector<7x9xf32>
    %c0_30 = arith.constant 0 : index
    %c0_31 = arith.constant 0 : index
    %44 = vector.load %arg7[%c0_30, %c0_31] : memref<7x1xi32, #tpu.memory_space<vmem>>, vector<7x1xi32>
    %45 = vector.broadcast %44 : vector<7x1xi32> to vector<7x9xi32>
    %46 = arith.cmpi eq, %45, %38 : vector<7x9xi32>
    %47 = arith.extui %46 : vector<7x9xi1> to vector<7x9xi32>
    %48 = arith.sitofp %47 : vector<7x9xi32> to vector<7x9xf32>
    %49 = arith.addf %43, %48 : vector<7x9xf32>
    %c0_32 = arith.constant 0 : index
    %c0_33 = arith.constant 0 : index
    %50 = vector.load %arg8[%c0_32, %c0_33] : memref<7x1xi32, #tpu.memory_space<vmem>>, vector<7x1xi32>
    %51 = tpu.iota {dimensions = array<i32: 1>} : vector<7x22xi32>
    %52 = vector.broadcast %50 : vector<7x1xi32> to vector<7x22xi32>
    %53 = arith.cmpi eq, %52, %51 : vector<7x22xi32>
    %54 = arith.extui %53 : vector<7x22xi1> to vector<7x22xi32>
    %55 = arith.sitofp %54 : vector<7x22xi32> to vector<7x22xf32>
    %cst_34 = arith.constant dense<0.000000e+00> : vector<7x8xf32>
    %56 = tpu.matmul %49, %37, %cst_34 {dimension_numbers = #tpu.dot_dimension_numbers<[1], [0], [0], [1], [0, 0, 1, 1], [], []>} : vector<7x9xf32>, vector<9x8xf32>, vector<7x8xf32> -> vector<7x8xf32>
    %cst_35 = arith.constant dense<0.000000e+00> : vector<7x8xf32>
    %57 = tpu.matmul %55, %0, %cst_35 {dimension_numbers = #tpu.dot_dimension_numbers<[1], [0], [0], [1], [0, 0, 1, 1], [], []>} : vector<7x22xf32>, vector<22x8xf32>, vector<7x8xf32> -> vector<7x8xf32>
    %58 = arith.subf %56, %57 : vector<7x8xf32>
    %c0_36 = arith.constant 0 : index
    %c0_37 = arith.constant 0 : index
    %59 = vector.load %arg11[%c0_36, %c0_37] : memref<7x1xf32, #tpu.memory_space<vmem>>, vector<7x1xf32>
    %60 = vector.broadcast %59 : vector<7x1xf32> to vector<7x8xf32>
    %61 = arith.mulf %58, %60 : vector<7x8xf32>
    %c0_38 = arith.constant 0 : index
    %c0_39 = arith.constant 0 : index
    %62 = vector.load %arg9[%c0_38, %c0_39] : memref<30x1xi32, #tpu.memory_space<vmem>>, vector<30x1xi32>
    %63 = tpu.iota {dimensions = array<i32: 1>} : vector<30x7xi32>
    %64 = vector.broadcast %62 : vector<30x1xi32> to vector<30x7xi32>
    %65 = arith.cmpi eq, %64, %63 : vector<30x7xi32>
    %66 = arith.extui %65 : vector<30x7xi1> to vector<30x7xi32>
    %67 = arith.sitofp %66 : vector<30x7xi32> to vector<30x7xf32>
    %c0_40 = arith.constant 0 : index
    %c0_41 = arith.constant 0 : index
    %68 = vector.load %arg10[%c0_40, %c0_41] : memref<30x1xi32, #tpu.memory_space<vmem>>, vector<30x1xi32>
    %69 = tpu.iota {dimensions = array<i32: 1>} : vector<30x9xi32>
    %70 = vector.broadcast %68 : vector<30x1xi32> to vector<30x9xi32>
    %71 = arith.cmpi eq, %70, %69 : vector<30x9xi32>
    %72 = arith.extui %71 : vector<30x9xi1> to vector<30x9xi32>
    %73 = arith.sitofp %72 : vector<30x9xi32> to vector<30x9xf32>
    %cst_42 = arith.constant dense<0.000000e+00> : vector<30x8xf32>
    %74 = tpu.matmul %67, %61, %cst_42 {dimension_numbers = #tpu.dot_dimension_numbers<[1], [0], [0], [1], [0, 0, 1, 1], [], []>} : vector<30x7xf32>, vector<7x8xf32>, vector<30x8xf32> -> vector<30x8xf32>
    %cst_43 = arith.constant dense<0.000000e+00> : vector<30x8xf32>
    %75 = tpu.matmul %73, %33, %cst_43 {dimension_numbers = #tpu.dot_dimension_numbers<[1], [0], [0], [1], [0, 0, 1, 1], [], []>} : vector<30x9xf32>, vector<9x8xf32>, vector<30x8xf32> -> vector<30x8xf32>
    %76 = arith.addf %74, %75 : vector<30x8xf32>
    %c0_44 = arith.constant 0 : index
    %c0_45 = arith.constant 0 : index
    %77 = vector.load %arg16[%c0_44, %c0_45] : memref<8x16xf32, #tpu.memory_space<vmem>>, vector<8x16xf32>
    %cst_46 = arith.constant dense<0.000000e+00> : vector<30x16xf32>
    %78 = tpu.matmul %76, %77, %cst_46 {dimension_numbers = #tpu.dot_dimension_numbers<[1], [0], [0], [1], [0, 0, 1, 1], [], []>} : vector<30x8xf32>, vector<8x16xf32>, vector<30x16xf32> -> vector<30x16xf32>
    %c0_47 = arith.constant 0 : index
    %c0_48 = arith.constant 0 : index
    %79 = vector.load %arg17[%c0_47, %c0_48] : memref<1x16xf32, #tpu.memory_space<vmem>>, vector<1x16xf32>
    %80 = vector.broadcast %79 : vector<1x16xf32> to vector<30x16xf32>
    %81 = arith.addf %78, %80 : vector<30x16xf32>
    %cst_49 = arith.constant 0.000000e+00 : f32
    %82 = vector.broadcast %cst_49 : f32 to vector<30x16xf32>
    %83 = arith.cmpf oge, %81, %82 : vector<30x16xf32>
    %cst_50 = arith.constant 0.00999999977 : f32
    %84 = vector.broadcast %cst_50 : f32 to vector<30x16xf32>
    %85 = arith.mulf %84, %81 : vector<30x16xf32>
    %86 = arith.select %83, %81, %85 : vector<30x16xi1>, vector<30x16xf32>
    %c0_51 = arith.constant 0 : index
    %c0_52 = arith.constant 0 : index
    %87 = vector.load %arg19[%c0_51, %c0_52] : memref<30x16xf32, #tpu.memory_space<vmem>>, vector<30x16xf32>
    tpu.vector_store %arg19[%c0_51, %c0_52], %86 {strides = array<i32>} : memref<30x16xf32, #tpu.memory_space<vmem>>, vector<30x16xf32>,
    return
  }
}

</mosaic_0001>

<llo_original>
// kernel: tpu_custom_call.1
$region0: #{tpu_custom_call.1}
  #allocation0 [shape = 'u32[]', space=smem, size = 0x4, offset = 0x4, fixed_abs, tag = 'smem constant byte address 0x4 - core index']
  #allocation1 [shape = 'u32[144,128]{1,0:T(1,128)}', space=vmem, size = 0x12000, scoped, tag = 'internal scratch']
  #allocation2 [shape = 'f32[1,1]{1,0:T(1,128)S(1)}', space=vmem, size = 0x200, scoped, tag = 'scoped memory for tpu_custom_call.1']
  %s0 = inlined_call_operand.vmem [shape: f32[9,8], index: 0, kind: input, shape index: {}]
  %s1 = inlined_call_operand.vmem [shape: f32[9,9], index: 1, kind: input, shape index: {}]
  %s2 = inlined_call_operand.vmem [shape: f32[9,1], index: 2, kind: input, shape index: {}]
  %s3 = inlined_call_operand.vmem [shape: f32[22,8], index: 3, kind: input, shape index: {}]
  %s4 = inlined_call_operand.vmem [shape: s32[1,22], index: 4, kind: input, shape index: {}]
  %s5 = inlined_call_operand.vmem [shape: f32[22,1], index: 5, kind: input, shape index: {}]
  %s6 = inlined_call_operand.vmem [shape: s32[7,1], index: 6, kind: input, shape index: {}]
  %s7 = inlined_call_operand.vmem [shape: s32[7,1], index: 7, kind: input, shape index: {}]
  %s8 = inlined_call_operand.vmem [shape: s32[7,1], index: 8, kind: input, shape index: {}]
  %s9 = inlined_call_operand.vmem [shape: s32[30,1], index: 9, kind: input, shape index: {}]
  %s10 = inlined_call_operand.vmem [shape: s32[30,1], index: 10, kind: input, shape index: {}]
  %s11 = inlined_call_operand.vmem [shape: f32[7,1], index: 11, kind: input, shape index: {}]
  %s12 = inlined_call_operand.vmem [shape: f32[8,1], index: 12, kind: input, shape index: {}]
  %s13 = inlined_call_operand.<no memory space> [shape: f32[1,1], index: 13, kind: input, shape index: {}]
  %s14 = inlined_call_operand.vmem [shape: f32[8,16], index: 14, kind: input, shape index: {}]
  %s15 = inlined_call_operand.vmem [shape: f32[1,16], index: 15, kind: input, shape index: {}]
  %s16 = inlined_call_operand.vmem [shape: f32[8,16], index: 16, kind: input, shape index: {}]
  %s17 = inlined_call_operand.vmem [shape: f32[1,16], index: 17, kind: input, shape index: {}]
  %s18 = inlined_call_operand.hbm [shape: f32[9,16], index: 18, kind: output, shape index: {0}]
  %s19 = inlined_call_operand.vmem [shape: f32[30,16], index: 19, kind: output, shape index: {1}]
  %20 = xla_tuple %s18, %s19
  %s21 = sld [smem:[#allocation0]]
  $region90: #{tpu_custom_call.1} parent=0
    _
  %s23 = ssub.s32 1, %s21
  %s24 = scalar_select 0, %s23, %s21
  %v25 = vstv %s13
  %26 = vst [vmem:[#allocation2] sm:$0x1] %v25
  $region1: #{tpu_custom_call.1} parent=0
    #allocation3 [shape = 'u8[8192]{0}', space=vmem, size = 0x2000, scoped, tag = 'output window, operand 0, single buffered']
    #allocation4 [shape = 's32[1]{0}', space=sflag, size = 0x4, scoped, tag = 'scoped memory for tpu_custom_call.1']
    %27 = vsyncpa [#allocation4], 0
    // Predicated region
    $region2: #{tpu_custom_call.1} parent=1 // pred_check
      _
    $region3: #{tpu_custom_call.1} parent=1 // pred_check_branch
      %29 = sbr.rel (0) target = $region5
    $region4: #{tpu_custom_call.1} parent=1 // pred_region
      _
    $region5: #{tpu_custom_call.1} parent=1 // pred_fallthru
      _
    // Predicated region
    $region6: #{tpu_custom_call.1} parent=1 // pred_check
      _
    $region7: #{tpu_custom_call.1} parent=1 // pred_check_branch
      %31 = sbr.rel (0) target = $region9
    $region8: #{tpu_custom_call.1} parent=1 // pred_region
      _
    $region9: #{tpu_custom_call.1} parent=1 // pred_fallthru
      _
    // Predicated region
    $region10: #{tpu_custom_call.1} parent=1 // pred_check
      _
    $region11: #{tpu_custom_call.1} parent=1 // pred_check_branch
      %33 = sbr.rel (0) target = $region13
    $region12: #{tpu_custom_call.1} parent=1 // pred_region
      _
    $region13: #{tpu_custom_call.1} parent=1 // pred_fallthru
      _
    // Predicated region
    $region14: #{tpu_custom_call.1} parent=1 // pred_check
      _
    $region15: #{tpu_custom_call.1} parent=1 // pred_check_branch
      %35 = sbr.rel (0) target = $region17
    $region16: #{tpu_custom_call.1} parent=1 // pred_region
      _
    $region17: #{tpu_custom_call.1} parent=1 // pred_fallthru
      _
    // Predicated region
    $region18: #{tpu_custom_call.1} parent=1 // pred_check
      _
    $region19: #{tpu_custom_call.1} parent=1 // pred_check_branch
      %37 = sbr.rel (0) target = $region21
    $region20: #{tpu_custom_call.1} parent=1 // pred_region
      _
    $region21: #{tpu_custom_call.1} parent=1 // pred_fallthru
      _
    // Predicated region
    $region22: #{tpu_custom_call.1} parent=1 // pred_check
      _
    $region23: #{tpu_custom_call.1} parent=1 // pred_check_branch
      %39 = sbr.rel (0) target = $region25
    $region24: #{tpu_custom_call.1} parent=1 // pred_region
      _
    $region25: #{tpu_custom_call.1} parent=1 // pred_fallthru
      _
    // Predicated region
    $region26: #{tpu_custom_call.1} parent=1 // pred_check
      _
    $region27: #{tpu_custom_call.1} parent=1 // pred_check_branch
      %41 = sbr.rel (0) target = $region29
    $region28: #{tpu_custom_call.1} parent=1 // pred_region
      _
    $region29: #{tpu_custom_call.1} parent=1 // pred_fallthru
      _
    // Predicated region
    $region30: #{tpu_custom_call.1} parent=1 // pred_check
      _
    $region31: #{tpu_custom_call.1} parent=1 // pred_check_branch
      %43 = sbr.rel (0) target = $region33
    $region32: #{tpu_custom_call.1} parent=1 // pred_region
      _
    $region33: #{tpu_custom_call.1} parent=1 // pred_fallthru
      _
    // Predicated region
    $region34: #{tpu_custom_call.1} parent=1 // pred_check
      _
    $region35: #{tpu_custom_call.1} parent=1 // pred_check_branch
      %45 = sbr.rel (0) target = $region37
    $region36: #{tpu_custom_call.1} parent=1 // pred_region
      _
    $region37: #{tpu_custom_call.1} parent=1 // pred_fallthru
      _
    // Predicated region
    $region38: #{tpu_custom_call.1} parent=1 // pred_check
      _
    $region39: #{tpu_custom_call.1} parent=1 // pred_check_branch
      %47 = sbr.rel (0) target = $region41
    $region40: #{tpu_custom_call.1} parent=1 // pred_region
      _
    $region41: #{tpu_custom_call.1} parent=1 // pred_fallthru
      _
    // Predicated region
    $region42: #{tpu_custom_call.1} parent=1 // pred_check
      _
    $region43: #{tpu_custom_call.1} parent=1 // pred_check_branch
      %49 = sbr.rel (0) target = $region45
    $region44: #{tpu_custom_call.1} parent=1 // pred_region
      _
    $region45: #{tpu_custom_call.1} parent=1 // pred_fallthru
      _
    // Predicated region
    $region46: #{tpu_custom_call.1} parent=1 // pred_check
      _
    $region47: #{tpu_custom_call.1} parent=1 // pred_check_branch
      %51 = sbr.rel (0) target = $region49
    $region48: #{tpu_custom_call.1} parent=1 // pred_region
      _
    $region49: #{tpu_custom_call.1} parent=1 // pred_fallthru
      _
    // Predicated region
    $region50: #{tpu_custom_call.1} parent=1 // pred_check
      _
    $region51: #{tpu_custom_call.1} parent=1 // pred_check_branch
      %53 = sbr.rel (0) target = $region53
    $region52: #{tpu_custom_call.1} parent=1 // pred_region
      _
    $region53: #{tpu_custom_call.1} parent=1 // pred_fallthru
      _
    // Predicated region
    $region54: #{tpu_custom_call.1} parent=1 // pred_check
      _
    $region55: #{tpu_custom_call.1} parent=1 // pred_check_branch
      %55 = sbr.rel (0) target = $region57
    $region56: #{tpu_custom_call.1} parent=1 // pred_region
      _
    $region57: #{tpu_custom_call.1} parent=1 // pred_fallthru
      _
    // Predicated region
    $region58: #{tpu_custom_call.1} parent=1 // pred_check
      _
    $region59: #{tpu_custom_call.1} parent=1 // pred_check_branch
      %57 = sbr.rel (0) target = $region61
    $region60: #{tpu_custom_call.1} parent=1 // pred_region
      _
    $region61: #{tpu_custom_call.1} parent=1 // pred_fallthru
      _
    // Predicated region
    $region62: #{tpu_custom_call.1} parent=1 // pred_check
      _
    $region63: #{tpu_custom_call.1} parent=1 // pred_check_branch
      %59 = sbr.rel (0) target = $region65
    $region64: #{tpu_custom_call.1} parent=1 // pred_region
      _
    $region65: #{tpu_custom_call.1} parent=1 // pred_fallthru
      _
    // Predicated region
    $region66: #{tpu_custom_call.1} parent=1 // pred_check
      _
    $region67: #{tpu_custom_call.1} parent=1 // pred_check_branch
      %61 = sbr.rel (0) target = $region69
    $region68: #{tpu_custom_call.1} parent=1 // pred_region
      _
    $region69: #{tpu_custom_call.1} parent=1 // pred_fallthru
      _
    // Predicated region
    $region70: #{tpu_custom_call.1} parent=1 // pred_check
      _
    $region71: #{tpu_custom_call.1} parent=1 // pred_check_branch
      %63 = sbr.rel (0) target = $region73
    $region72: #{tpu_custom_call.1} parent=1 // pred_region
      _
    $region73: #{tpu_custom_call.1} parent=1 // pred_fallthru
      _
    %v64 = vld [vmem:[%s3] sm:$0xff]
    %v65 = vld [vmem:[%s3 + $0x8] sm:$0xff]
    %v66 = vld [vmem:[%s3 + $0x10] sm:$0x3f]
    %v67 = vld [vmem:[%s2] sm:$0xff]
    %v68 = vld [vmem:[%s2 + $0x8] sm:$0x1]
    %v69 = vld [vmem:[%s12] sm:$0xff]
    %v70 = vld [vmem:[#allocation2] sm:$0x1]
    %v72 = vlaneseq
    %v73 = vshrl.u32 %v72, 7
    %v74 = vsub.s32 0, %v73
    %v75 = vrot.slane %v70, %v74
    %vm77 = vcmask 64512
    %v79 = vsel %vm77, %v64, 0
    %v82 = vsel %vm77, %v65, 0
    %v85 = vsel %vm77, %v66, 0
    %87 = vmatprep.subr.mxu0 0.0
    %88 = vmatpush1.msra.mxu0 %v69
    %89 = vmatprep.subr.mxu0 0.0
    %90 = vmatpush1.msra.mxu0 0.0
    %91 = vmatprep.subr.mxu0 0.0
    %92 = vmatpush1.msra.mxu0 0.0
    %93 = vmatprep.subr.mxu0 0.0
    %94 = vmatpush1.msra.mxu0 0.0
    %95 = vmatprep.subr.mxu0 0.0
    %96 = vmatpush1.msra.mxu0 0.0
    %97 = vmatprep.subr.mxu0 0.0
    %98 = vmatpush1.msra.mxu0 0.0
    %99 = vmatprep.subr.mxu0 0.0
    %100 = vmatpush1.msra.mxu0 0.0
    %101 = vmatprep.subr.mxu0 0.0
    %102 = vmatpush1.msra.mxu0 0.0
    %103 = vmatprep.subr.mxu0 0.0
    %104 = vmatpush1.msra.mxu0 0.0
    %105 = vmatprep.subr.mxu0 0.0
    %106 = vmatpush1.msra.mxu0 0.0
    %107 = vmatprep.subr.mxu0 0.0
    %108 = vmatpush1.msra.mxu0 0.0
    %109 = vmatprep.subr.mxu0 0.0
    %110 = vmatpush1.msra.mxu0 0.0
    %111 = vmatprep.subr.mxu0 0.0
    %112 = vmatpush1.msra.mxu0 0.0
    %113 = vmatprep.subr.mxu0 0.0
    %114 = vmatpush1.msra.mxu0 0.0
    %115 = vmatprep.subr.mxu0 0.0
    %116 = vmatpush1.msra.mxu0 0.0
    %117 = vmatprep.subr.mxu0 0.0
    %118 = vmatpush1.msra.mxu0 0.0
    %119 = vmatprep.subr.mxu0 0.0
    %120 = vmatpush1.msra.mxu0 0.0
    %121 = vmatprep.subr.mxu0 0.0
    %122 = vmatpush1.msra.mxu0 0.0
    %123 = vmatprep.subr.mxu0 0.0
    %124 = vmatpush1.msra.mxu0 0.0
    %125 = vmatprep.subr.mxu0 0.0
    %126 = vmatpush1.msra.mxu0 0.0
    %127 = vmatprep.subr.mxu0 0.0
    %128 = vmatpush1.msra.mxu0 0.0
    %129 = vmatprep.subr.mxu0 0.0
    %130 = vmatpush1.msra.mxu0 0.0
    %131 = vmatprep.subr.mxu0 0.0
    %132 = vmatpush1.msra.mxu0 0.0
    %133 = vmatprep.subr.mxu0 0.0
    %134 = vmatpush1.msra.mxu0 0.0
    %135 = vmatprep.subr.mxu0 0.0
    %136 = vmatpush1.msra.mxu0 0.0
    %137 = vmatprep.subr.mxu0 0.0
    %138 = vmatpush1.msra.mxu0 0.0
    %139 = vmatprep.subr.mxu0 0.0
    %140 = vmatpush1.msra.mxu0 0.0
    %141 = vmatprep.subr.mxu0 0.0
    %142 = vmatpush1.msra.mxu0 0.0
    %143 = vmatprep.subr.mxu0 0.0
    %144 = vmatpush1.msra.mxu0 0.0
    %145 = vmatprep.subr.mxu0 0.0
    %146 = vmatpush1.msra.mxu0 0.0
    %147 = vmatprep.subr.mxu0 0.0
    %148 = vmatpush1.msra.mxu0 0.0
    %149 = vmatprep.subr.mxu0 0.0
    %150 = vmatpush1.msra.mxu0 0.0
    %151 = vmatprep.mubr.f32.mxu0 0.0
    %152 = vmatmul.mubr.f32.gmra.mrb[0].mxu0 %v79
    %v153 = vpop.f32.mrb[0].mxu0
    %v154 = vadd.f32 %v75, %v153
    %v155 = vpop.f32.mrb[0].mxu0
    %156 = vmatprep.mubr.f32.mxu0 0.0
    %157 = vmatmul.mubr.f32.gmra.mrb[0].mxu0 %v82
    %v158 = vpop.f32.mrb[0].mxu0
    %v159 = vadd.f32 %v75, %v158
    %v160 = vpop.f32.mrb[0].mxu0
    %161 = vmatprep.mubr.f32.mxu0 0.0
    %162 = vmatmul.mubr.f32.gmra.mrb[0].mxu0 %v85
    %v163 = vpop.f32.mrb[0].mxu0
    %v164 = vadd.f32 %v75, %v163
    %v165 = vpop.f32.mrb[0].mxu0
    %166 = vdwg.mxu0
    %vm167 = vcmp.ge.f32.partialorder %v154, 0.0
    %vm168 = vcmp.ge.f32.partialorder %v159, 0.0
    %vm169 = vcmp.ge.f32.partialorder %v164, 0.0
    %v170 = vmul.f32 %v154, 0.01
    %v171 = vmul.f32 %v159, 0.01
    %v172 = vmul.f32 %v164, 0.01
    %v173 = vsel %vm167, %v154, %v170
    %v174 = vsel %vm168, %v159, %v171
    %v175 = vsel %vm169, %v164, %v172
    %v176 = vlaneseq
    %v177 = vshrl.u32 %v176, 7
    %v178 = vadd.s32 %v177, 8
    %v179 = vld [vmem:[%s4] sm:$0x1]
    %v180 = vlaneseq
    %v181 = vshrl.u32 %v180, 7
    %v182 = vsub.s32 0, %v181
    %v183 = vrot.slane %v179, %v182
    %vm184 = vcmp.eq.s32.totalorder %v177, %v183
    %vm185 = vcmp.eq.s32.totalorder %v178, %v183
    %v186 = vsel %vm184, 1, 0
    %v187 = vsel %vm185, 1, 0
    %v188 = vcvt.s32.f32 %v186
    %v189 = vcvt.s32.f32 %v187
    %vm190 = vcmask 179200
    %v192 = vsel %vm190, %v188, 0
    %v195 = vsel %vm190, %v189, 0
    %vm197 = vcmask 1045504
    %v199 = vsel %vm197, %v175, 0
    %201 = vmatprep.subr.mxu0 0.0
    %202 = vmatpush1.msra.mxu0 %v173
    %203 = vmatprep.subr.mxu0 0.0
    %204 = vmatpush1.msra.mxu0 %v174
    %205 = vmatprep.subr.mxu0 0.0
    %206 = vmatpush1.msra.mxu0 %v199
    %207 = vmatprep.subr.mxu0 0.0
    %208 = vmatpush1.msra.mxu0 0.0
    %209 = vmatprep.subr.mxu0 0.0
    %210 = vmatpush1.msra.mxu0 0.0
    %211 = vmatprep.subr.mxu0 0.0
    %212 = vmatpush1.msra.mxu0 0.0
    %213 = vmatprep.subr.mxu0 0.0
    %214 = vmatpush1.msra.mxu0 0.0
    %215 = vmatprep.subr.mxu0 0.0
    %216 = vmatpush1.msra.mxu0 0.0
    %217 = vmatprep.subr.mxu0 0.0
    %218 = vmatpush1.msra.mxu0 0.0
    %219 = vmatprep.subr.mxu0 0.0
    %220 = vmatpush1.msra.mxu0 0.0
    %221 = vmatprep.subr.mxu0 0.0
    %222 = vmatpush1.msra.mxu0 0.0
    %223 = vmatprep.subr.mxu0 0.0
    %224 = vmatpush1.msra.mxu0 0.0
    %225 = vmatprep.subr.mxu0 0.0
    %226 = vmatpush1.msra.mxu0 0.0
    %227 = vmatprep.subr.mxu0 0.0
    %228 = vmatpush1.msra.mxu0 0.0
    %229 = vmatprep.subr.mxu0 0.0
    %230 = vmatpush1.msra.mxu0 0.0
    %231 = vmatprep.subr.mxu0 0.0
    %232 = vmatpush1.msra.mxu0 0.0
    %233 = vmatprep.subr.mxu0 0.0
    %234 = vmatpush1.msra.mxu0 0.0
    %235 = vmatprep.subr.mxu0 0.0
    %236 = vmatpush1.msra.mxu0 0.0
    %237 = vmatprep.subr.mxu0 0.0
    %238 = vmatpush1.msra.mxu0 0.0
    %239 = vmatprep.subr.mxu0 0.0
    %240 = vmatpush1.msra.mxu0 0.0
    %241 = vmatprep.subr.mxu0 0.0
    %242 = vmatpush1.msra.mxu0 0.0
    %243 = vmatprep.subr.mxu0 0.0
    %244 = vmatpush1.msra.mxu0 0.0
    %245 = vmatprep.subr.mxu0 0.0
    %246 = vmatpush1.msra.mxu0 0.0
    %247 = vmatprep.subr.mxu0 0.0
    %248 = vmatpush1.msra.mxu0 0.0
    %249 = vmatprep.subr.mxu0 0.0
    %250 = vmatpush1.msra.mxu0 0.0
    %251 = vmatprep.subr.mxu0 0.0
    %252 = vmatpush1.msra.mxu0 0.0
    %253 = vmatprep.subr.mxu0 0.0
    %254 = vmatpush1.msra.mxu0 0.0
    %255 = vmatprep.subr.mxu0 0.0
    %256 = vmatpush1.msra.mxu0 0.0
    %257 = vmatprep.subr.mxu0 0.0
    %258 = vmatpush1.msra.mxu0 0.0
    %259 = vmatprep.subr.mxu0 0.0
    %260 = vmatpush1.msra.mxu0 0.0
    %261 = vmatprep.subr.mxu0 0.0
    %262 = vmatpush1.msra.mxu0 0.0
    %263 = vmatprep.subr.mxu0 0.0
    %264 = vmatpush1.msra.mxu0 0.0
    %265 = vmatprep.mubr.f32.mxu0 0.0
    %266 = vmatmul.mubr.f32.gmra.mrb[0].mxu0 %v192
    %v267 = vpop.f32.mrb[0].mxu0
    %v268 = vadd.f32 0.0, %v267
    %v269 = vpop.f32.mrb[0].mxu0
    %270 = vmatprep.mubr.f32.mxu0 0.0
    %271 = vmatmul.mubr.f32.gmra.mrb[0].mxu0 %v195
    %v272 = vpop.f32.mrb[0].mxu0
    %v273 = vadd.f32 0.0, %v272
    %v274 = vpop.f32.mrb[0].mxu0
    %275 = vdwg.mxu0
    %v276 = vmul.f32 %v268, %v67
    %v277 = vmul.f32 %v273, %v68
    %v278 = vld [vmem:[%s0] sm:$0xff]
    %v279 = vld [vmem:[%s0 + $0x8] sm:$0x1]
    %281 = vset.pattern.permute.xlu0 0
    %282 = vperm.xlu0 %281, %v276
    %v283 = vpop.permute.xlu0 %282
    %286 = vset.pattern.permute.xlu0 0
    %287 = vperm.xlu0 %286, %v277
    %v288 = vpop.permute.xlu0 %287
    %v290 = vmul.f32 %v283, %v278
    %v291 = vmul.f32 %v288, %v279
    %v292 = vld [vmem:[%s1] sm:$0xff]
    %v293 = vld [vmem:[%s1 + $0x8] sm:$0x1]
    %vm294 = vcmask 72704
    %v296 = vsel %vm294, %v292, 0
    %v299 = vsel %vm294, %v293, 0
    %vm301 = vcmask 1040384
    %v303 = vsel %vm301, %v291, 0
    %305 = vmatprep.subr.mxu0 0.0
    %306 = vmatpush1.msra.mxu0 %v290
    %307 = vmatprep.subr.mxu0 0.0
    %308 = vmatpush1.msra.mxu0 %v303
    %309 = vmatprep.subr.mxu0 0.0
    %310 = vmatpush1.msra.mxu0 0.0
    %311 = vmatprep.subr.mxu0 0.0
    %312 = vmatpush1.msra.mxu0 0.0
    %313 = vmatprep.subr.mxu0 0.0
    %314 = vmatpush1.msra.mxu0 0.0
    %315 = vmatprep.subr.mxu0 0.0
    %316 = vmatpush1.msra.mxu0 0.0
    %317 = vmatprep.subr.mxu0 0.0
    %318 = vmatpush1.msra.mxu0 0.0
    %319 = vmatprep.subr.mxu0 0.0
    %320 = vmatpush1.msra.mxu0 0.0
    %321 = vmatprep.subr.mxu0 0.0
    %322 = vmatpush1.msra.mxu0 0.0
    %323 = vmatprep.subr.mxu0 0.0
    %324 = vmatpush1.msra.mxu0 0.0
    %325 = vmatprep.subr.mxu0 0.0
    %326 = vmatpush1.msra.mxu0 0.0
    %327 = vmatprep.subr.mxu0 0.0
    %328 = vmatpush1.msra.mxu0 0.0
    %329 = vmatprep.subr.mxu0 0.0
    %330 = vmatpush1.msra.mxu0 0.0
    %331 = vmatprep.subr.mxu0 0.0
    %332 = vmatpush1.msra.mxu0 0.0
    %333 = vmatprep.subr.mxu0 0.0
    %334 = vmatpush1.msra.mxu0 0.0
    %335 = vmatprep.subr.mxu0 0.0
    %336 = vmatpush1.msra.mxu0 0.0
    %337 = vmatprep.subr.mxu0 0.0
    %338 = vmatpush1.msra.mxu0 0.0
    %339 = vmatprep.subr.mxu0 0.0
    %340 = vmatpush1.msra.mxu0 0.0
    %341 = vmatprep.subr.mxu0 0.0
    %342 = vmatpush1.msra.mxu0 0.0
    %343 = vmatprep.subr.mxu0 0.0
    %344 = vmatpush1.msra.mxu0 0.0
    %345 = vmatprep.subr.mxu0 0.0
    %346 = vmatpush1.msra.mxu0 0.0
    %347 = vmatprep.subr.mxu0 0.0
    %348 = vmatpush1.msra.mxu0 0.0
    %349 = vmatprep.subr.mxu0 0.0
    %350 = vmatpush1.msra.mxu0 0.0
    %351 = vmatprep.subr.mxu0 0.0
    %352 = vmatpush1.msra.mxu0 0.0
    %353 = vmatprep.subr.mxu0 0.0
    %354 = vmatpush1.msra.mxu0 0.0
    %355 = vmatprep.subr.mxu0 0.0
    %356 = vmatpush1.msra.mxu0 0.0
    %357 = vmatprep.subr.mxu0 0.0
    %358 = vmatpush1.msra.mxu0 0.0
    %359 = vmatprep.subr.mxu0 0.0
    %360 = vmatpush1.msra.mxu0 0.0
    %361 = vmatprep.subr.mxu0 0.0
    %362 = vmatpush1.msra.mxu0 0.0
    %363 = vmatprep.subr.mxu0 0.0
    %364 = vmatpush1.msra.mxu0 0.0
    %365 = vmatprep.subr.mxu0 0.0
    %366 = vmatpush1.msra.mxu0 0.0
    %367 = vmatprep.subr.mxu0 0.0
    %368 = vmatpush1.msra.mxu0 0.0
    %369 = vmatprep.mubr.f32.mxu0 0.0
    %370 = vmatmul.mubr.f32.gmra.mrb[0].mxu0 %v296
    %v371 = vpop.f32.mrb[0].mxu0
    %v372 = vadd.f32 0.0, %v371
    %v373 = vpop.f32.mrb[0].mxu0
    %374 = vmatprep.mubr.f32.mxu0 0.0
    %375 = vmatmul.mubr.f32.gmra.mrb[0].mxu0 %v299
    %v376 = vpop.f32.mrb[0].mxu0
    %v377 = vadd.f32 0.0, %v376
    %v378 = vpop.f32.mrb[0].mxu0
    %379 = vdwg.mxu0
    %v380 = vld [vmem:[%s14] sm:$0xff]
    %v381 = vld [vmem:[%s15] sm:$0x1]
    %v383 = vlaneseq
    %v384 = vshrl.u32 %v383, 7
    %v385 = vsub.s32 0, %v384
    %v386 = vrot.slane %v381, %v385
    %v389 = vsel %vm77, %v372, 0
    %v392 = vsel %vm77, %v377, 0
    %394 = vmatprep.subr.mxu0 0.0
    %395 = vmatpush1.msra.mxu0 %v380
    %396 = vmatprep.subr.mxu0 0.0
    %397 = vmatpush1.msra.mxu0 0.0
    %398 = vmatprep.subr.mxu0 0.0
    %399 = vmatpush1.msra.mxu0 0.0
    %400 = vmatprep.subr.mxu0 0.0
    %401 = vmatpush1.msra.mxu0 0.0
    %402 = vmatprep.subr.mxu0 0.0
    %403 = vmatpush1.msra.mxu0 0.0
    %404 = vmatprep.subr.mxu0 0.0
    %405 = vmatpush1.msra.mxu0 0.0
    %406 = vmatprep.subr.mxu0 0.0
    %407 = vmatpush1.msra.mxu0 0.0
    %408 = vmatprep.subr.mxu0 0.0
    %409 = vmatpush1.msra.mxu0 0.0
    %410 = vmatprep.subr.mxu0 0.0
    %411 = vmatpush1.msra.mxu0 0.0
    %412 = vmatprep.subr.mxu0 0.0
    %413 = vmatpush1.msra.mxu0 0.0
    %414 = vmatprep.subr.mxu0 0.0
    %415 = vmatpush1.msra.mxu0 0.0
    %416 = vmatprep.subr.mxu0 0.0
    %417 = vmatpush1.msra.mxu0 0.0
    %418 = vmatprep.subr.mxu0 0.0
    %419 = vmatpush1.msra.mxu0 0.0
    %420 = vmatprep.subr.mxu0 0.0
    %421 = vmatpush1.msra.mxu0 0.0
    %422 = vmatprep.subr.mxu0 0.0
    %423 = vmatpush1.msra.mxu0 0.0
    %424 = vmatprep.subr.mxu0 0.0
    %425 = vmatpush1.msra.mxu0 0.0
    %426 = vmatprep.subr.mxu0 0.0
    %427 = vmatpush1.msra.mxu0 0.0
    %428 = vmatprep.subr.mxu0 0.0
    %429 = vmatpush1.msra.mxu0 0.0
    %430 = vmatprep.subr.mxu0 0.0
    %431 = vmatpush1.msra.mxu0 0.0
    %432 = vmatprep.subr.mxu0 0.0
    %433 = vmatpush1.msra.mxu0 0.0
    %434 = vmatprep.subr.mxu0 0.0
    %435 = vmatpush1.msra.mxu0 0.0
    %436 = vmatprep.subr.mxu0 0.0
    %437 = vmatpush1.msra.mxu0 0.0
    %438 = vmatprep.subr.mxu0 0.0
    %439 = vmatpush1.msra.mxu0 0.0
    %440 = vmatprep.subr.mxu0 0.0
    %441 = vmatpush1.msra.mxu0 0.0
    %442 = vmatprep.subr.mxu0 0.0
    %443 = vmatpush1.msra.mxu0 0.0
    %444 = vmatprep.subr.mxu0 0.0
    %445 = vmatpush1.msra.mxu0 0.0
    %446 = vmatprep.subr.mxu0 0.0
    %447 = vmatpush1.msra.mxu0 0.0
    %448 = vmatprep.subr.mxu0 0.0
    %449 = vmatpush1.msra.mxu0 0.0
    %450 = vmatprep.subr.mxu0 0.0
    %451 = vmatpush1.msra.mxu0 0.0
    %452 = vmatprep.subr.mxu0 0.0
    %453 = vmatpush1.msra.mxu0 0.0
    %454 = vmatprep.subr.mxu0 0.0
    %455 = vmatpush1.msra.mxu0 0.0
    %456 = vmatprep.subr.mxu0 0.0
    %457 = vmatpush1.msra.mxu0 0.0
    %458 = vmatprep.mubr.f32.mxu0 0.0
    %459 = vmatmul.mubr.f32.gmra.mrb[0].mxu0 %v389
    %v460 = vpop.f32.mrb[0].mxu0
    %v461 = vadd.f32 %v386, %v460
    %v462 = vpop.f32.mrb[0].mxu0
    %463 = vmatprep.mubr.f32.mxu0 0.0
    %464 = vmatmul.mubr.f32.gmra.mrb[0].mxu0 %v392
    %v465 = vpop.f32.mrb[0].mxu0
    %v466 = vadd.f32 %v386, %v465
    %v467 = vpop.f32.mrb[0].mxu0
    %468 = vdwg.mxu0
    %vm469 = vcmask 130048
    %470 = vst.msk [vmem:[#allocation3] sm:$0xff] %vm469, %v461
    %vm471 = vcmask 122880
    %472 = vst.msk [vmem:[#allocation3 + $0x8] sm:$0x1] %vm471, %v466
    %v473 = vsel %vm197, %v66, 0
    %475 = vmatprep.subr.mxu0 0.0
    %476 = vmatpush1.msra.mxu0 %v64
    %477 = vmatprep.subr.mxu0 0.0
    %478 = vmatpush1.msra.mxu0 %v65
    %479 = vmatprep.subr.mxu0 0.0
    %480 = vmatpush1.msra.mxu0 %v473
    %481 = vmatprep.subr.mxu0 0.0
    %482 = vmatpush1.msra.mxu0 0.0
    %483 = vmatprep.subr.mxu0 0.0
    %484 = vmatpush1.msra.mxu0 0.0
    %485 = vmatprep.subr.mxu0 0.0
    %486 = vmatpush1.msra.mxu0 0.0
    %487 = vmatprep.subr.mxu0 0.0
    %488 = vmatpush1.msra.mxu0 0.0
    %489 = vmatprep.subr.mxu0 0.0
    %490 = vmatpush1.msra.mxu0 0.0
    %491 = vmatprep.subr.mxu0 0.0
    %492 = vmatpush1.msra.mxu0 0.0
    %493 = vmatprep.subr.mxu0 0.0
    %494 = vmatpush1.msra.mxu0 0.0
    %495 = vmatprep.subr.mxu0 0.0
    %496 = vmatpush1.msra.mxu0 0.0
    %497 = vmatprep.subr.mxu0 0.0
    %498 = vmatpush1.msra.mxu0 0.0
    %499 = vmatprep.subr.mxu0 0.0
    %500 = vmatpush1.msra.mxu0 0.0
    %501 = vmatprep.subr.mxu0 0.0
    %502 = vmatpush1.msra.mxu0 0.0
    %503 = vmatprep.subr.mxu0 0.0
    %504 = vmatpush1.msra.mxu0 0.0
    %505 = vmatprep.subr.mxu0 0.0
    %506 = vmatpush1.msra.mxu0 0.0
    %507 = vmatprep.subr.mxu0 0.0
    %508 = vmatpush1.msra.mxu0 0.0
    %509 = vmatprep.subr.mxu0 0.0
    %510 = vmatpush1.msra.mxu0 0.0
    %511 = vmatprep.subr.mxu0 0.0
    %512 = vmatpush1.msra.mxu0 0.0
    %513 = vmatprep.subr.mxu0 0.0
    %514 = vmatpush1.msra.mxu0 0.0
    %515 = vmatprep.subr.mxu0 0.0
    %516 = vmatpush1.msra.mxu0 0.0
    %517 = vmatprep.subr.mxu0 0.0
    %518 = vmatpush1.msra.mxu0 0.0
    %519 = vmatprep.subr.mxu0 0.0
    %520 = vmatpush1.msra.mxu0 0.0
    %521 = vmatprep.subr.mxu0 0.0
    %522 = vmatpush1.msra.mxu0 0.0
    %523 = vmatprep.subr.mxu0 0.0
    %524 = vmatpush1.msra.mxu0 0.0
    %525 = vmatprep.subr.mxu0 0.0
    %526 = vmatpush1.msra.mxu0 0.0
    %527 = vmatprep.subr.mxu0 0.0
    %528 = vmatpush1.msra.mxu0 0.0
    %529 = vmatprep.subr.mxu0 0.0
    %530 = vmatpush1.msra.mxu0 0.0
    %531 = vmatprep.subr.mxu0 0.0
    %532 = vmatpush1.msra.mxu0 0.0
    %533 = vmatprep.subr.mxu0 0.0
    %534 = vmatpush1.msra.mxu0 0.0
    %535 = vmatprep.subr.mxu0 0.0
    %536 = vmatpush1.msra.mxu0 0.0
    %537 = vmatprep.subr.mxu0 0.0
    %538 = vmatpush1.msra.mxu0 0.0
    %539 = vmatprep.mubr.f32.mxu0 0.0
    %540 = vmatmul.mubr.f32.gmra.mrb[0].mxu0 %v192
    %v541 = vpop.f32.mrb[0].mxu0
    %v542 = vadd.f32 0.0, %v541
    %v543 = vpop.f32.mrb[0].mxu0
    %544 = vmatprep.mubr.f32.mxu0 0.0
    %545 = vmatmul.mubr.f32.gmra.mrb[0].mxu0 %v195
    %v546 = vpop.f32.mrb[0].mxu0
    %v547 = vadd.f32 0.0, %v546
    %v548 = vpop.f32.mrb[0].mxu0
    %549 = vdwg.mxu0
    %551 = vset.pattern.permute.xlu0 0
    %552 = vperm.xlu0 %551, %v67
    %v553 = vpop.permute.xlu0 %552
    %556 = vset.pattern.permute.xlu0 0
    %557 = vperm.xlu0 %556, %v68
    %v558 = vpop.permute.xlu0 %557
    %v560 = vmul.f32 %v542, %v553
    %v561 = vmul.f32 %v547, %v558
    %v562 = vld [vmem:[%s5] sm:$0xff]
    %v563 = vld [vmem:[%s5 + $0x8] sm:$0xff]
    %v564 = vld [vmem:[%s5 + $0x10] sm:$0x3f]
    %566 = vset.pattern.permute.xlu0 0
    %567 = vperm.xlu0 %566, %v562
    %v568 = vpop.permute.xlu0 %567
    %571 = vset.pattern.permute.xlu0 0
    %572 = vperm.xlu0 %571, %v563
    %v573 = vpop.permute.xlu0 %572
    %576 = vset.pattern.permute.xlu0 0
    %577 = vperm.xlu0 %576, %v564
    %v578 = vpop.permute.xlu0 %577
    %v580 = vmul.f32 %v64, %v568
    %v581 = vmul.f32 %v65, %v573
    %v582 = vmul.f32 %v66, %v578
    %v584 = vsel %vm197, %v582, 0
    %586 = vmatprep.subr.mxu0 0.0
    %587 = vmatpush1.msra.mxu0 %v580
    %588 = vmatprep.subr.mxu0 0.0
    %589 = vmatpush1.msra.mxu0 %v581
    %590 = vmatprep.subr.mxu0 0.0
    %591 = vmatpush1.msra.mxu0 %v584
    %592 = vmatprep.subr.mxu0 0.0
    %593 = vmatpush1.msra.mxu0 0.0
    %594 = vmatprep.subr.mxu0 0.0
    %595 = vmatpush1.msra.mxu0 0.0
    %596 = vmatprep.subr.mxu0 0.0
    %597 = vmatpush1.msra.mxu0 0.0
    %598 = vmatprep.subr.mxu0 0.0
    %599 = vmatpush1.msra.mxu0 0.0
    %600 = vmatprep.subr.mxu0 0.0
    %601 = vmatpush1.msra.mxu0 0.0
    %602 = vmatprep.subr.mxu0 0.0
    %603 = vmatpush1.msra.mxu0 0.0
    %604 = vmatprep.subr.mxu0 0.0
    %605 = vmatpush1.msra.mxu0 0.0
    %606 = vmatprep.subr.mxu0 0.0
    %607 = vmatpush1.msra.mxu0 0.0
    %608 = vmatprep.subr.mxu0 0.0
    %609 = vmatpush1.msra.mxu0 0.0
    %610 = vmatprep.subr.mxu0 0.0
    %611 = vmatpush1.msra.mxu0 0.0
    %612 = vmatprep.subr.mxu0 0.0
    %613 = vmatpush1.msra.mxu0 0.0
    %614 = vmatprep.subr.mxu0 0.0
    %615 = vmatpush1.msra.mxu0 0.0
    %616 = vmatprep.subr.mxu0 0.0
    %617 = vmatpush1.msra.mxu0 0.0
    %618 = vmatprep.subr.mxu0 0.0
    %619 = vmatpush1.msra.mxu0 0.0
    %620 = vmatprep.subr.mxu0 0.0
    %621 = vmatpush1.msra.mxu0 0.0
    %622 = vmatprep.subr.mxu0 0.0
    %623 = vmatpush1.msra.mxu0 0.0
    %624 = vmatprep.subr.mxu0 0.0
    %625 = vmatpush1.msra.mxu0 0.0
    %626 = vmatprep.subr.mxu0 0.0
    %627 = vmatpush1.msra.mxu0 0.0
    %628 = vmatprep.subr.mxu0 0.0
    %629 = vmatpush1.msra.mxu0 0.0
    %630 = vmatprep.subr.mxu0 0.0
    %631 = vmatpush1.msra.mxu0 0.0
    %632 = vmatprep.subr.mxu0 0.0
    %633 = vmatpush1.msra.mxu0 0.0
    %634 = vmatprep.subr.mxu0 0.0
    %635 = vmatpush1.msra.mxu0 0.0
    %636 = vmatprep.subr.mxu0 0.0
    %637 = vmatpush1.msra.mxu0 0.0
    %638 = vmatprep.subr.mxu0 0.0
    %639 = vmatpush1.msra.mxu0 0.0
    %640 = vmatprep.subr.mxu0 0.0
    %641 = vmatpush1.msra.mxu0 0.0
    %642 = vmatprep.subr.mxu0 0.0
    %643 = vmatpush1.msra.mxu0 0.0
    %644 = vmatprep.subr.mxu0 0.0
    %645 = vmatpush1.msra.mxu0 0.0
    %646 = vmatprep.subr.mxu0 0.0
    %647 = vmatpush1.msra.mxu0 0.0
    %648 = vmatprep.subr.mxu0 0.0
    %649 = vmatpush1.msra.mxu0 0.0
    %650 = vmatprep.mubr.f32.mxu0 0.0
    %651 = vmatmul.mubr.f32.gmra.mrb[0].mxu0 %v192
    %v652 = vpop.f32.mrb[0].mxu0
    %v653 = vadd.f32 0.0, %v652
    %v654 = vpop.f32.mrb[0].mxu0
    %655 = vmatprep.mubr.f32.mxu0 0.0
    %656 = vmatmul.mubr.f32.gmra.mrb[0].mxu0 %v195
    %v657 = vpop.f32.mrb[0].mxu0
    %v658 = vadd.f32 0.0, %v657
    %v659 = vpop.f32.mrb[0].mxu0
    %660 = vdwg.mxu0
    %v661 = vlaneseq
    %v662 = vand.u32 %v661, 127
    %v663 = vld [vmem:[%s6] sm:$0x7f]
    %664 = vset.pattern.permute.xlu0 0
    %665 = vperm.xlu0 %664, %v663
    %v666 = vpop.permute.xlu0 %665
    %vm667 = vcmp.eq.s32.totalorder %v666, %v662
    %v668 = vsel %vm667, 1, 0
    %v669 = vcvt.s32.f32 %v668
    %v670 = vld [vmem:[%s7] sm:$0x7f]
    %671 = vset.pattern.permute.xlu0 0
    %672 = vperm.xlu0 %671, %v670
    %v673 = vpop.permute.xlu0 %672
    %vm674 = vcmp.eq.s32.totalorder %v673, %v662
    %v675 = vsel %vm674, 1, 0
    %v676 = vcvt.s32.f32 %v675
    %v677 = vadd.f32 %v669, %v676
    %v678 = vld [vmem:[%s8] sm:$0x7f]
    %679 = vset.pattern.permute.xlu0 0
    %680 = vperm.xlu0 %679, %v678
    %v681 = vpop.permute.xlu0 %680
    %vm682 = vcmp.eq.s32.totalorder %v681, %v662
    %v683 = vsel %vm682, 1, 0
    %v684 = vcvt.s32.f32 %v683
    %v686 = vsel %vm294, %v677, 0
    %v689 = vsel %vm301, %v658, 0
    %691 = vmatprep.subr.mxu0 0.0
    %692 = vmatpush1.msra.mxu0 %v653
    %693 = vmatprep.subr.mxu0 0.0
    %694 = vmatpush1.msra.mxu0 %v689
    %695 = vmatprep.subr.mxu0 0.0
    %696 = vmatpush1.msra.mxu0 0.0
    %697 = vmatprep.subr.mxu0 0.0
    %698 = vmatpush1.msra.mxu0 0.0
    %699 = vmatprep.subr.mxu0 0.0
    %700 = vmatpush1.msra.mxu0 0.0
    %701 = vmatprep.subr.mxu0 0.0
    %702 = vmatpush1.msra.mxu0 0.0
    %703 = vmatprep.subr.mxu0 0.0
    %704 = vmatpush1.msra.mxu0 0.0
    %705 = vmatprep.subr.mxu0 0.0
    %706 = vmatpush1.msra.mxu0 0.0
    %707 = vmatprep.subr.mxu0 0.0
    %708 = vmatpush1.msra.mxu0 0.0
    %709 = vmatprep.subr.mxu0 0.0
    %710 = vmatpush1.msra.mxu0 0.0
    %711 = vmatprep.subr.mxu0 0.0
    %712 = vmatpush1.msra.mxu0 0.0
    %713 = vmatprep.subr.mxu0 0.0
    %714 = vmatpush1.msra.mxu0 0.0
    %715 = vmatprep.subr.mxu0 0.0
    %716 = vmatpush1.msra.mxu0 0.0
    %717 = vmatprep.subr.mxu0 0.0
    %718 = vmatpush1.msra.mxu0 0.0
    %719 = vmatprep.subr.mxu0 0.0
    %720 = vmatpush1.msra.mxu0 0.0
    %721 = vmatprep.subr.mxu0 0.0
    %722 = vmatpush1.msra.mxu0 0.0
    %723 = vmatprep.subr.mxu0 0.0
    %724 = vmatpush1.msra.mxu0 0.0
    %725 = vmatprep.subr.mxu0 0.0
    %726 = vmatpush1.msra.mxu0 0.0
    %727 = vmatprep.subr.mxu0 0.0
    %728 = vmatpush1.msra.mxu0 0.0
    %729 = vmatprep.subr.mxu0 0.0
    %730 = vmatpush1.msra.mxu0 0.0
    %731 = vmatprep.subr.mxu0 0.0
    %732 = vmatpush1.msra.mxu0 0.0
    %733 = vmatprep.subr.mxu0 0.0
    %734 = vmatpush1.msra.mxu0 0.0
    %735 = vmatprep.subr.mxu0 0.0
    %736 = vmatpush1.msra.mxu0 0.0
    %737 = vmatprep.subr.mxu0 0.0
    %738 = vmatpush1.msra.mxu0 0.0
    %739 = vmatprep.subr.mxu0 0.0
    %740 = vmatpush1.msra.mxu0 0.0
    %741 = vmatprep.subr.mxu0 0.0
    %742 = vmatpush1.msra.mxu0 0.0
    %743 = vmatprep.subr.mxu0 0.0
    %744 = vmatpush1.msra.mxu0 0.0
    %745 = vmatprep.subr.mxu0 0.0
    %746 = vmatpush1.msra.mxu0 0.0
    %747 = vmatprep.subr.mxu0 0.0
    %748 = vmatpush1.msra.mxu0 0.0
    %749 = vmatprep.subr.mxu0 0.0
    %750 = vmatpush1.msra.mxu0 0.0
    %751 = vmatprep.subr.mxu0 0.0
    %752 = vmatpush1.msra.mxu0 0.0
    %753 = vmatprep.subr.mxu0 0.0
    %754 = vmatpush1.msra.mxu0 0.0
    %755 = vmatprep.mubr.f32.mxu0 0.0
    %756 = vmatmul.mubr.f32.gmra.mrb[0].mxu0 %v686
    %v757 = vpop.f32.mrb[0].mxu0
    %v758 = vadd.f32 0.0, %v757
    %v759 = vpop.f32.mrb[0].mxu0
    %760 = vdwg.mxu0
    %v762 = vsel %vm190, %v684, 0
    %764 = vmatprep.subr.mxu0 0.0
    %765 = vmatpush1.msra.mxu0 %v64
    %766 = vmatprep.subr.mxu0 0.0
    %767 = vmatpush1.msra.mxu0 %v65
    %768 = vmatprep.subr.mxu0 0.0
    %769 = vmatpush1.msra.mxu0 %v473
    %770 = vmatprep.subr.mxu0 0.0
    %771 = vmatpush1.msra.mxu0 0.0
    %772 = vmatprep.subr.mxu0 0.0
    %773 = vmatpush1.msra.mxu0 0.0
    %774 = vmatprep.subr.mxu0 0.0
    %775 = vmatpush1.msra.mxu0 0.0
    %776 = vmatprep.subr.mxu0 0.0
    %777 = vmatpush1.msra.mxu0 0.0
    %778 = vmatprep.subr.mxu0 0.0
    %779 = vmatpush1.msra.mxu0 0.0
    %780 = vmatprep.subr.mxu0 0.0
    %781 = vmatpush1.msra.mxu0 0.0
    %782 = vmatprep.subr.mxu0 0.0
    %783 = vmatpush1.msra.mxu0 0.0
    %784 = vmatprep.subr.mxu0 0.0
    %785 = vmatpush1.msra.mxu0 0.0
    %786 = vmatprep.subr.mxu0 0.0
    %787 = vmatpush1.msra.mxu0 0.0
    %788 = vmatprep.subr.mxu0 0.0
    %789 = vmatpush1.msra.mxu0 0.0
    %790 = vmatprep.subr.mxu0 0.0
    %791 = vmatpush1.msra.mxu0 0.0
    %792 = vmatprep.subr.mxu0 0.0
    %793 = vmatpush1.msra.mxu0 0.0
    %794 = vmatprep.subr.mxu0 0.0
    %795 = vmatpush1.msra.mxu0 0.0
    %796 = vmatprep.subr.mxu0 0.0
    %797 = vmatpush1.msra.mxu0 0.0
    %798 = vmatprep.subr.mxu0 0.0
    %799 = vmatpush1.msra.mxu0 0.0
    %800 = vmatprep.subr.mxu0 0.0
    %801 = vmatpush1.msra.mxu0 0.0
    %802 = vmatprep.subr.mxu0 0.0
    %803 = vmatpush1.msra.mxu0 0.0
    %804 = vmatprep.subr.mxu0 0.0
    %805 = vmatpush1.msra.mxu0 0.0
    %806 = vmatprep.subr.mxu0 0.0
    %807 = vmatpush1.msra.mxu0 0.0
    %808 = vmatprep.subr.mxu0 0.0
    %809 = vmatpush1.msra.mxu0 0.0
    %810 = vmatprep.subr.mxu0 0.0
    %811 = vmatpush1.msra.mxu0 0.0
    %812 = vmatprep.subr.mxu0 0.0
    %813 = vmatpush1.msra.mxu0 0.0
    %814 = vmatprep.subr.mxu0 0.0
    %815 = vmatpush1.msra.mxu0 0.0
    %816 = vmatprep.subr.mxu0 0.0
    %817 = vmatpush1.msra.mxu0 0.0
    %818 = vmatprep.subr.mxu0 0.0
    %819 = vmatpush1.msra.mxu0 0.0
    %820 = vmatprep.subr.mxu0 0.0
    %821 = vmatpush1.msra.mxu0 0.0
    %822 = vmatprep.subr.mxu0 0.0
    %823 = vmatpush1.msra.mxu0 0.0
    %824 = vmatprep.subr.mxu0 0.0
    %825 = vmatpush1.msra.mxu0 0.0
    %826 = vmatprep.subr.mxu0 0.0
    %827 = vmatpush1.msra.mxu0 0.0
    %828 = vmatprep.mubr.f32.mxu0 0.0
    %829 = vmatmul.mubr.f32.gmra.mrb[0].mxu0 %v762
    %v830 = vpop.f32.mrb[0].mxu0
    %v831 = vadd.f32 0.0, %v830
    %v832 = vpop.f32.mrb[0].mxu0
    %833 = vdwg.mxu0
    %v834 = vsub.f32 %v758, %v831
    %v835 = vld [vmem:[%s11] sm:$0x7f]
    %837 = vset.pattern.permute.xlu0 0
    %838 = vperm.xlu0 %837, %v835
    %v839 = vpop.permute.xlu0 %838
    %v841 = vmul.f32 %v834, %v839
    %v842 = vld [vmem:[%s9] sm:$0xff]
    %v843 = vld [vmem:[%s9 + $0x8] sm:$0xff]
    %v844 = vld [vmem:[%s9 + $0x10] sm:$0xff]
    %v845 = vld [vmem:[%s9 + $0x18] sm:$0x3f]
    %846 = vset.pattern.permute.xlu0 0
    %847 = vperm.xlu0 %846, %v842
    %v848 = vpop.permute.xlu0 %847
    %849 = vset.pattern.permute.xlu0 0
    %850 = vperm.xlu0 %849, %v843
    %v851 = vpop.permute.xlu0 %850
    %852 = vset.pattern.permute.xlu0 0
    %853 = vperm.xlu0 %852, %v844
    %v854 = vpop.permute.xlu0 %853
    %855 = vset.pattern.permute.xlu0 0
    %856 = vperm.xlu0 %855, %v845
    %v857 = vpop.permute.xlu0 %856
    %vm858 = vcmp.eq.s32.totalorder %v848, %v662
    %vm859 = vcmp.eq.s32.totalorder %v851, %v662
    %vm860 = vcmp.eq.s32.totalorder %v854, %v662
    %vm861 = vcmp.eq.s32.totalorder %v857, %v662
    %v862 = vsel %vm858, 1, 0
    %v863 = vsel %vm859, 1, 0
    %v864 = vsel %vm860, 1, 0
    %v865 = vsel %vm861, 1, 0
    %v866 = vcvt.s32.f32 %v862
    %v867 = vcvt.s32.f32 %v863
    %v868 = vcvt.s32.f32 %v864
    %v869 = vcvt.s32.f32 %v865
    %v870 = vld [vmem:[%s10] sm:$0xff]
    %v871 = vld [vmem:[%s10 + $0x8] sm:$0xff]
    %v872 = vld [vmem:[%s10 + $0x10] sm:$0xff]
    %v873 = vld [vmem:[%s10 + $0x18] sm:$0x3f]
    %874 = vset.pattern.permute.xlu0 0
    %875 = vperm.xlu0 %874, %v870
    %v876 = vpop.permute.xlu0 %875
    %877 = vset.pattern.permute.xlu0 0
    %878 = vperm.xlu0 %877, %v871
    %v879 = vpop.permute.xlu0 %878
    %880 = vset.pattern.permute.xlu0 0
    %881 = vperm.xlu0 %880, %v872
    %v882 = vpop.permute.xlu0 %881
    %883 = vset.pattern.permute.xlu0 0
    %884 = vperm.xlu0 %883, %v873
    %v885 = vpop.permute.xlu0 %884
    %vm886 = vcmp.eq.s32.totalorder %v876, %v662
    %vm887 = vcmp.eq.s32.totalorder %v879, %v662
    %vm888 = vcmp.eq.s32.totalorder %v882, %v662
    %vm889 = vcmp.eq.s32.totalorder %v885, %v662
    %v890 = vsel %vm886, 1, 0
    %v891 = vsel %vm887, 1, 0
    %v892 = vsel %vm888, 1, 0
    %v893 = vsel %vm889, 1, 0
    %v894 = vcvt.s32.f32 %v890
    %v895 = vcvt.s32.f32 %v891
    %v896 = vcvt.s32.f32 %v892
    %v897 = vcvt.s32.f32 %v893
    %v899 = vsel %vm294, %v894, 0
    %v902 = vsel %vm294, %v895, 0
    %v905 = vsel %vm294, %v896, 0
    %v908 = vsel %vm294, %v897, 0
    %v911 = vsel %vm301, %v561, 0
    %913 = vmatprep.subr.mxu0 0.0
    %914 = vmatpush1.msra.mxu0 %v560
    %915 = vmatprep.subr.mxu0 0.0
    %916 = vmatpush1.msra.mxu0 %v911
    %917 = vmatprep.subr.mxu0 0.0
    %918 = vmatpush1.msra.mxu0 0.0
    %919 = vmatprep.subr.mxu0 0.0
    %920 = vmatpush1.msra.mxu0 0.0
    %921 = vmatprep.subr.mxu0 0.0
    %922 = vmatpush1.msra.mxu0 0.0
    %923 = vmatprep.subr.mxu0 0.0
    %924 = vmatpush1.msra.mxu0 0.0
    %925 = vmatprep.subr.mxu0 0.0
    %926 = vmatpush1.msra.mxu0 0.0
    %927 = vmatprep.subr.mxu0 0.0
    %928 = vmatpush1.msra.mxu0 0.0
    %929 = vmatprep.subr.mxu0 0.0
    %930 = vmatpush1.msra.mxu0 0.0
    %931 = vmatprep.subr.mxu0 0.0
    %932 = vmatpush1.msra.mxu0 0.0
    %933 = vmatprep.subr.mxu0 0.0
    %934 = vmatpush1.msra.mxu0 0.0
    %935 = vmatprep.subr.mxu0 0.0
    %936 = vmatpush1.msra.mxu0 0.0
    %937 = vmatprep.subr.mxu0 0.0
    %938 = vmatpush1.msra.mxu0 0.0
    %939 = vmatprep.subr.mxu0 0.0
    %940 = vmatpush1.msra.mxu0 0.0
    %941 = vmatprep.subr.mxu0 0.0
    %942 = vmatpush1.msra.mxu0 0.0
    %943 = vmatprep.subr.mxu0 0.0
    %944 = vmatpush1.msra.mxu0 0.0
    %945 = vmatprep.subr.mxu0 0.0
    %946 = vmatpush1.msra.mxu0 0.0
    %947 = vmatprep.subr.mxu0 0.0
    %948 = vmatpush1.msra.mxu0 0.0
    %949 = vmatprep.subr.mxu0 0.0
    %950 = vmatpush1.msra.mxu0 0.0
    %951 = vmatprep.subr.mxu0 0.0
    %952 = vmatpush1.msra.mxu0 0.0
    %953 = vmatprep.subr.mxu0 0.0
    %954 = vmatpush1.msra.mxu0 0.0
    %955 = vmatprep.subr.mxu0 0.0
    %956 = vmatpush1.msra.mxu0 0.0
    %957 = vmatprep.subr.mxu0 0.0
    %958 = vmatpush1.msra.mxu0 0.0
    %959 = vmatprep.subr.mxu0 0.0
    %960 = vmatpush1.msra.mxu0 0.0
    %961 = vmatprep.subr.mxu0 0.0
    %962 = vmatpush1.msra.mxu0 0.0
    %963 = vmatprep.subr.mxu0 0.0
    %964 = vmatpush1.msra.mxu0 0.0
    %965 = vmatprep.subr.mxu0 0.0
    %966 = vmatpush1.msra.mxu0 0.0
    %967 = vmatprep.subr.mxu0 0.0
    %968 = vmatpush1.msra.mxu0 0.0
    %969 = vmatprep.subr.mxu0 0.0
    %970 = vmatpush1.msra.mxu0 0.0
    %971 = vmatprep.subr.mxu0 0.0
    %972 = vmatpush1.msra.mxu0 0.0
    %973 = vmatprep.subr.mxu0 0.0
    %974 = vmatpush1.msra.mxu0 0.0
    %975 = vmatprep.subr.mxu0 0.0
    %976 = vmatpush1.msra.mxu0 0.0
    %977 = vmatprep.mubr.f32.mxu0 0.0
    %978 = vmatmul.mubr.f32.gmra.mrb[0].mxu0 %v899
    %v979 = vpop.f32.mrb[0].mxu0
    %v980 = vadd.f32 0.0, %v979
    %v981 = vpop.f32.mrb[0].mxu0
    %982 = vmatprep.mubr.f32.mxu0 0.0
    %983 = vmatmul.mubr.f32.gmra.mrb[0].mxu0 %v902
    %v984 = vpop.f32.mrb[0].mxu0
    %v985 = vadd.f32 0.0, %v984
    %v986 = vpop.f32.mrb[0].mxu0
    %987 = vmatprep.mubr.f32.mxu0 0.0
    %988 = vmatmul.mubr.f32.gmra.mrb[0].mxu0 %v905
    %v989 = vpop.f32.mrb[0].mxu0
    %v990 = vadd.f32 0.0, %v989
    %v991 = vpop.f32.mrb[0].mxu0
    %992 = vmatprep.mubr.f32.mxu0 0.0
    %993 = vmatmul.mubr.f32.gmra.mrb[0].mxu0 %v908
    %v994 = vpop.f32.mrb[0].mxu0
    %v995 = vadd.f32 0.0, %v994
    %v996 = vpop.f32.mrb[0].mxu0
    %997 = vdwg.mxu0
    %vm998 = vcmask 56320
    %v1000 = vsel %vm998, %v866, 0
    %v1003 = vsel %vm998, %v867, 0
    %v1006 = vsel %vm998, %v868, 0
    %v1009 = vsel %vm998, %v869, 0
    %vm1011 = vcmask 1046528
    %v1013 = vsel %vm1011, %v841, 0
    %1015 = vmatprep.subr.mxu0 0.0
    %1016 = vmatpush1.msra.mxu0 %v1013
    %1017 = vmatprep.subr.mxu0 0.0
    %1018 = vmatpush1.msra.mxu0 0.0
    %1019 = vmatprep.subr.mxu0 0.0
    %1020 = vmatpush1.msra.mxu0 0.0
    %1021 = vmatprep.subr.mxu0 0.0
    %1022 = vmatpush1.msra.mxu0 0.0
    %1023 = vmatprep.subr.mxu0 0.0
    %1024 = vmatpush1.msra.mxu0 0.0
    %1025 = vmatprep.subr.mxu0 0.0
    %1026 = vmatpush1.msra.mxu0 0.0
    %1027 = vmatprep.subr.mxu0 0.0
    %1028 = vmatpush1.msra.mxu0 0.0
    %1029 = vmatprep.subr.mxu0 0.0
    %1030 = vmatpush1.msra.mxu0 0.0
    %1031 = vmatprep.subr.mxu0 0.0
    %1032 = vmatpush1.msra.mxu0 0.0
    %1033 = vmatprep.subr.mxu0 0.0
    %1034 = vmatpush1.msra.mxu0 0.0
    %1035 = vmatprep.subr.mxu0 0.0
    %1036 = vmatpush1.msra.mxu0 0.0
    %1037 = vmatprep.subr.mxu0 0.0
    %1038 = vmatpush1.msra.mxu0 0.0
    %1039 = vmatprep.subr.mxu0 0.0
    %1040 = vmatpush1.msra.mxu0 0.0
    %1041 = vmatprep.subr.mxu0 0.0
    %1042 = vmatpush1.msra.mxu0 0.0
    %1043 = vmatprep.subr.mxu0 0.0
    %1044 = vmatpush1.msra.mxu0 0.0
    %1045 = vmatprep.subr.mxu0 0.0
    %1046 = vmatpush1.msra.mxu0 0.0
    %1047 = vmatprep.subr.mxu0 0.0
    %1048 = vmatpush1.msra.mxu0 0.0
    %1049 = vmatprep.subr.mxu0 0.0
    %1050 = vmatpush1.msra.mxu0 0.0
    %1051 = vmatprep.subr.mxu0 0.0
    %1052 = vmatpush1.msra.mxu0 0.0
    %1053 = vmatprep.subr.mxu0 0.0
    %1054 = vmatpush1.msra.mxu0 0.0
    %1055 = vmatprep.subr.mxu0 0.0
    %1056 = vmatpush1.msra.mxu0 0.0
    %1057 = vmatprep.subr.mxu0 0.0
    %1058 = vmatpush1.msra.mxu0 0.0
    %1059 = vmatprep.subr.mxu0 0.0
    %1060 = vmatpush1.msra.mxu0 0.0
    %1061 = vmatprep.subr.mxu0 0.0
    %1062 = vmatpush1.msra.mxu0 0.0
    %1063 = vmatprep.subr.mxu0 0.0
    %1064 = vmatpush1.msra.mxu0 0.0
    %1065 = vmatprep.subr.mxu0 0.0
    %1066 = vmatpush1.msra.mxu0 0.0
    %1067 = vmatprep.subr.mxu0 0.0
    %1068 = vmatpush1.msra.mxu0 0.0
    %1069 = vmatprep.subr.mxu0 0.0
    %1070 = vmatpush1.msra.mxu0 0.0
    %1071 = vmatprep.subr.mxu0 0.0
    %1072 = vmatpush1.msra.mxu0 0.0
    %1073 = vmatprep.subr.mxu0 0.0
    %1074 = vmatpush1.msra.mxu0 0.0
    %1075 = vmatprep.subr.mxu0 0.0
    %1076 = vmatpush1.msra.mxu0 0.0
    %1077 = vmatprep.subr.mxu0 0.0
    %1078 = vmatpush1.msra.mxu0 0.0
    %1079 = vmatprep.mubr.f32.mxu0 0.0
    %1080 = vmatmul.mubr.f32.gmra.mrb[0].mxu0 %v1000
    %v1081 = vpop.f32.mrb[0].mxu0
    %v1082 = vadd.f32 %v980, %v1081
    %v1083 = vpop.f32.mrb[0].mxu0
    %1084 = vmatprep.mubr.f32.mxu0 0.0
    %1085 = vmatmul.mubr.f32.gmra.mrb[0].mxu0 %v1003
    %v1086 = vpop.f32.mrb[0].mxu0
    %v1087 = vadd.f32 %v985, %v1086
    %v1088 = vpop.f32.mrb[0].mxu0
    %1089 = vmatprep.mubr.f32.mxu0 0.0
    %1090 = vmatmul.mubr.f32.gmra.mrb[0].mxu0 %v1006
    %v1091 = vpop.f32.mrb[0].mxu0
    %v1092 = vadd.f32 %v990, %v1091
    %v1093 = vpop.f32.mrb[0].mxu0
    %1094 = vmatprep.mubr.f32.mxu0 0.0
    %1095 = vmatmul.mubr.f32.gmra.mrb[0].mxu0 %v1009
    %v1096 = vpop.f32.mrb[0].mxu0
    %v1097 = vadd.f32 %v995, %v1096
    %v1098 = vpop.f32.mrb[0].mxu0
    %1099 = vdwg.mxu0
    %v1100 = vld [vmem:[%s16] sm:$0xff]
    %v1101 = vld [vmem:[%s17] sm:$0x1]
    %v1103 = vlaneseq
    %v1104 = vshrl.u32 %v1103, 7
    %v1105 = vsub.s32 0, %v1104
    %v1106 = vrot.slane %v1101, %v1105
    %v1109 = vsel %vm77, %v1082, 0
    %v1112 = vsel %vm77, %v1087, 0
    %v1115 = vsel %vm77, %v1092, 0
    %v1118 = vsel %vm77, %v1097, 0
    %1120 = vmatprep.subr.mxu0 0.0
    %1121 = vmatpush1.msra.mxu0 %v1100
    %1122 = vmatprep.subr.mxu0 0.0
    %1123 = vmatpush1.msra.mxu0 0.0
    %1124 = vmatprep.subr.mxu0 0.0
    %1125 = vmatpush1.msra.mxu0 0.0
    %1126 = vmatprep.subr.mxu0 0.0
    %1127 = vmatpush1.msra.mxu0 0.0
    %1128 = vmatprep.subr.mxu0 0.0
    %1129 = vmatpush1.msra.mxu0 0.0
    %1130 = vmatprep.subr.mxu0 0.0
    %1131 = vmatpush1.msra.mxu0 0.0
    %1132 = vmatprep.subr.mxu0 0.0
    %1133 = vmatpush1.msra.mxu0 0.0
    %1134 = vmatprep.subr.mxu0 0.0
    %1135 = vmatpush1.msra.mxu0 0.0
    %1136 = vmatprep.subr.mxu0 0.0
    %1137 = vmatpush1.msra.mxu0 0.0
    %1138 = vmatprep.subr.mxu0 0.0
    %1139 = vmatpush1.msra.mxu0 0.0
    %1140 = vmatprep.subr.mxu0 0.0
    %1141 = vmatpush1.msra.mxu0 0.0
    %1142 = vmatprep.subr.mxu0 0.0
    %1143 = vmatpush1.msra.mxu0 0.0
    %1144 = vmatprep.subr.mxu0 0.0
    %1145 = vmatpush1.msra.mxu0 0.0
    %1146 = vmatprep.subr.mxu0 0.0
    %1147 = vmatpush1.msra.mxu0 0.0
    %1148 = vmatprep.subr.mxu0 0.0
    %1149 = vmatpush1.msra.mxu0 0.0
    %1150 = vmatprep.subr.mxu0 0.0
    %1151 = vmatpush1.msra.mxu0 0.0
    %1152 = vmatprep.subr.mxu0 0.0
    %1153 = vmatpush1.msra.mxu0 0.0
    %1154 = vmatprep.subr.mxu0 0.0
    %1155 = vmatpush1.msra.mxu0 0.0
    %1156 = vmatprep.subr.mxu0 0.0
    %1157 = vmatpush1.msra.mxu0 0.0
    %1158 = vmatprep.subr.mxu0 0.0
    %1159 = vmatpush1.msra.mxu0 0.0
    %1160 = vmatprep.subr.mxu0 0.0
    %1161 = vmatpush1.msra.mxu0 0.0
    %1162 = vmatprep.subr.mxu0 0.0
    %1163 = vmatpush1.msra.mxu0 0.0
    %1164 = vmatprep.subr.mxu0 0.0
    %1165 = vmatpush1.msra.mxu0 0.0
    %1166 = vmatprep.subr.mxu0 0.0
    %1167 = vmatpush1.msra.mxu0 0.0
    %1168 = vmatprep.subr.mxu0 0.0
    %1169 = vmatpush1.msra.mxu0 0.0
    %1170 = vmatprep.subr.mxu0 0.0
    %1171 = vmatpush1.msra.mxu0 0.0
    %1172 = vmatprep.subr.mxu0 0.0
    %1173 = vmatpush1.msra.mxu0 0.0
    %1174 = vmatprep.subr.mxu0 0.0
    %1175 = vmatpush1.msra.mxu0 0.0
    %1176 = vmatprep.subr.mxu0 0.0
    %1177 = vmatpush1.msra.mxu0 0.0
    %1178 = vmatprep.subr.mxu0 0.0
    %1179 = vmatpush1.msra.mxu0 0.0
    %1180 = vmatprep.subr.mxu0 0.0
    %1181 = vmatpush1.msra.mxu0 0.0
    %1182 = vmatprep.subr.mxu0 0.0
    %1183 = vmatpush1.msra.mxu0 0.0
    %1184 = vmatprep.mubr.f32.mxu0 0.0
    %1185 = vmatmul.mubr.f32.gmra.mrb[0].mxu0 %v1109
    %v1186 = vpop.f32.mrb[0].mxu0
    %v1187 = vadd.f32 %v1106, %v1186
    %v1188 = vpop.f32.mrb[0].mxu0
    %1189 = vmatprep.mubr.f32.mxu0 0.0
    %1190 = vmatmul.mubr.f32.gmra.mrb[0].mxu0 %v1112
    %v1191 = vpop.f32.mrb[0].mxu0
    %v1192 = vadd.f32 %v1106, %v1191
    %v1193 = vpop.f32.mrb[0].mxu0
    %1194 = vmatprep.mubr.f32.mxu0 0.0
    %1195 = vmatmul.mubr.f32.gmra.mrb[0].mxu0 %v1115
    %v1196 = vpop.f32.mrb[0].mxu0
    %v1197 = vadd.f32 %v1106, %v1196
    %v1198 = vpop.f32.mrb[0].mxu0
    %1199 = vmatprep.mubr.f32.mxu0 0.0
    %1200 = vmatmul.mubr.f32.gmra.mrb[0].mxu0 %v1118
    %v1201 = vpop.f32.mrb[0].mxu0
    %v1202 = vadd.f32 %v1106, %v1201
    %v1203 = vpop.f32.mrb[0].mxu0
    %1204 = vdwg.mxu0
    %vm1205 = vcmp.ge.f32.partialorder %v1187, 0.0
    %vm1206 = vcmp.ge.f32.partialorder %v1192, 0.0
    %vm1207 = vcmp.ge.f32.partialorder %v1197, 0.0
    %vm1208 = vcmp.ge.f32.partialorder %v1202, 0.0
    %v1209 = vmul.f32 %v1187, 0.01
    %v1210 = vmul.f32 %v1192, 0.01
    %v1211 = vmul.f32 %v1197, 0.01
    %v1212 = vmul.f32 %v1202, 0.01
    %v1213 = vsel %vm1205, %v1187, %v1209
    %v1214 = vsel %vm1206, %v1192, %v1210
    %v1215 = vsel %vm1207, %v1197, %v1211
    %v1216 = vsel %vm1208, %v1202, %v1212
    %1217 = vst.msk [vmem:[%s19] sm:$0xff] %vm469, %v1213
    %1218 = vst.msk [vmem:[%s19 + $0x8] sm:$0xff] %vm469, %v1214
    %1219 = vst.msk [vmem:[%s19 + $0x10] sm:$0xff] %vm469, %v1215
    %vm1220 = vcmask 128000
    %1221 = vst.msk [vmem:[%s19 + $0x18] sm:$0x3f] %vm1220, %v1216
    // Predicated region
    $region74: #{tpu_custom_call.1} parent=1 // pred_check
      _
    $region75: #{tpu_custom_call.1} parent=1 // pred_check_branch
      %1223 = sbr.rel (0) target = $region77
    $region76: #{tpu_custom_call.1} parent=1 // pred_region
      %s1225 = ssub.s32 256, 256
      %1226 = vsyncadd [#allocation4], %s1225
      %s1227 = sshll.u32 [#allocation3], 4
      %s1228 = int_to_ptr.vmem [resolvable:$true] %s1227
      %1233 = dma.vmem_to_hbm [thread:$0]  %s1228, 256, %s18, [#allocation4], 128, 128, 8
    $region77: #{tpu_custom_call.1} parent=1 // pred_fallthru
      _
    // Predicated region
    $region78: #{tpu_custom_call.1} parent=1 // pred_check
      _
    $region79: #{tpu_custom_call.1} parent=1 // pred_check_branch
      %1235 = sbr.rel (0) target = $region81
    $region80: #{tpu_custom_call.1} parent=1 // pred_region
      _
    $region81: #{tpu_custom_call.1} parent=1 // pred_fallthru
      _
    // Predicated region
    $region82: #{tpu_custom_call.1} parent=1 // pred_check
      _
    $region83: #{tpu_custom_call.1} parent=1 // pred_check_branch
      %1237 = sbr.rel (0) target = $region85
    $region84: #{tpu_custom_call.1} parent=1 // pred_region
      %1238 = dma.done [#allocation4], 256
    $region85: #{tpu_custom_call.1} parent=1 // pred_fallthru
      _
    // Predicated region
    $region86: #{tpu_custom_call.1} parent=1 // pred_check
      _
    $region87: #{tpu_custom_call.1} parent=1 // pred_check_branch
      %1240 = sbr.rel (0) target = $region89
    $region88: #{tpu_custom_call.1} parent=1 // pred_region
      _
    $region89: #{tpu_custom_call.1} parent=1 // pred_fallthru
      _
    %1241 = vsyncpa [#allocation4], 1

</llo_original>
